<compile_context>
chip_gen: v7x
topology: tpu7x:2x2x1
jax: 0.10.0
libtpu: 0.0.40
codegen_flags: <defaults>
</compile_context>

<pallas_src>
import math

import jax
import jax.numpy as jnp
from jax import lax
from jax.experimental import pallas as pl
from jax.experimental.pallas import tpu as pltpu

# ---- model hyperparameters (small, consistent with the module) ----
EMBED_DIM = 32           # embed_dim
N_HEADS = 4              # n_heads (embed_dim % n_heads == 0)
HEAD_DIM = EMBED_DIM // N_HEADS
EXPANSION = 4            # expansion_factor
HIDDEN = EXPANSION * EMBED_DIM
LN_EPS = 1e-5
BATCH = 2
SEQ = 8                  # also plays the role of `block_size` for the tril buffer


def transformer_block_kernel(
    key_ref, query_ref, value_ref,   # (R, C) activations; R = batch_per_step * T (rows folded)
    mask_ref,                        # (R, R) f32 {0,1}: block-diag causal keep-mask
    proj_ref,                        # (4, C, C): block-diag WqT, WkT, WvT, and WoT
    w1t_ref, bff1_ref,               # (C, H), (1, H)   (pre-transposed FFN weight 1)
    w2t_ref,                         # (H, C)           (pre-transposed FFN weight 2)
    vec_ref,                         # (6+N_HEADS, C): bo, g1, beta1, bff2, g2, beta2, head masks
    out_ref,                         # (R, C)
):
    k_in = key_ref[...]
    q_in = query_ref[...]
    v_in = value_ref[...]

    # packed (1, C) parameter rows
    bo    = vec_ref[0:1, :]
    g1    = vec_ref[1:2, :]
    beta1 = vec_ref[2:3, :]
    bff2  = vec_ref[3:4, :]
    g2    = vec_ref[4:5, :]
    beta2 = vec_ref[5:6, :]

    # full-width projections through host-built block-diagonal, pre-transposed weights
    q = jnp.dot(q_in, proj_ref[0], preferred_element_type=jnp.float32)   # (R, C)
    k = jnp.dot(k_in, proj_ref[1], preferred_element_type=jnp.float32)   # (R, C)
    v = jnp.dot(v_in, proj_ref[2], preferred_element_type=jnp.float32)   # (R, C)
    kT = k.T                                                             # hoisted once (not per head)

    keep = mask_ref[...] > jnp.float32(0.5)                              # (R, R)
    inv_sqrt_d = jnp.float32(1.0 / math.sqrt(HEAD_DIM))
    neg_big = jnp.float32(-1e20)

    # Multi-head attention.  Per-head column masks keep all matmuls full (C)-wide
    # and accumulate each head's output directly into its column block -> no concat.
    attn_cat = None
    for h in range(N_HEADS):
        m_h = vec_ref[6 + h:7 + h, :]                                    # (1, C), {0,1}
        prod = jnp.dot(q * m_h, kT, preferred_element_type=jnp.float32)  # == q_h @ k_h.T  (R, R)
        # PyTorch order: masked_fill(-1e20) THEN divide by sqrt(Dh)
        prod = jnp.where(keep, prod, neg_big) * inv_sqrt_d
        prod = prod - jnp.max(prod, axis=-1, keepdims=True)
        p = jnp.exp(prod)
        p = p * pl.reciprocal(jnp.sum(p, axis=-1, keepdims=True), approx=False)
        contrib = jnp.dot(p, v * m_h, preferred_element_type=jnp.float32)  # head h cols only
        attn_cat = contrib if attn_cat is None else attn_cat + contrib

    attn = jnp.dot(attn_cat, proj_ref[3], preferred_element_type=jnp.float32) + bo

    # residual 1 + LayerNorm1
    resid1 = attn + v_in
    mu1 = jnp.mean(resid1, axis=-1, keepdims=True)
    var1 = jnp.mean((resid1 - mu1) ** 2, axis=-1, keepdims=True)
    norm1 = (resid1 - mu1) * lax.rsqrt(var1 + LN_EPS) * g1 + beta1
    # TODO(synk): nn.Dropout(0.2) is stochastic; implemented as identity (eval-mode).

    # feed-forward (weights pre-transposed on host)
    hdn = jnp.dot(norm1, w1t_ref[...], preferred_element_type=jnp.float32) + bff1_ref[...]
    hdn = jnp.maximum(hdn, 0.0)
    ff = jnp.dot(hdn, w2t_ref[...], preferred_element_type=jnp.float32) + bff2

    # residual 2 + LayerNorm2
    resid2 = ff + norm1
    mu2 = jnp.mean(resid2, axis=-1, keepdims=True)
    var2 = jnp.mean((resid2 - mu2) ** 2, axis=-1, keepdims=True)
    norm2 = (resid2 - mu2) * lax.rsqrt(var2 + LN_EPS) * g2 + beta2

    out_ref[...] = norm2.astype(out_ref.dtype)


def _pack_params(params):
    """Host-side packing: pre-transpose, block-diagonalize, and stack the tiny tensors."""
    eye_h = jnp.eye(N_HEADS, dtype=jnp.float32)

    def bd_t(w):  # per-head (Dh,Dh) Linear weight -> block-diagonal, pre-transposed (C,C)
        return jnp.kron(eye_h, w.T.astype(jnp.float32))

    proj = jnp.stack(
        [bd_t(params["wq"]), bd_t(params["wk"]), bd_t(params["wv"]),
         params["wo"].T.astype(jnp.float32)], axis=0)                     # (4, C, C)

    head_ids = jnp.arange(EMBED_DIM, dtype=jnp.int32) // HEAD_DIM
    head_mask = (head_ids[None, :] ==
                 jnp.arange(N_HEADS, dtype=jnp.int32)[:, None]).astype(jnp.float32)  # (H, C)

    vecs = jnp.concatenate(
        [params["bo"], params["g1"], params["beta1"],
         params["bff2"], params["g2"], params["beta2"], head_mask], axis=0)  # (6+H, C)

    return proj, params["w1"].T, params["bff1"], params["w2"].T, vecs


def transformer_block(key, query, value, params, *, batch_per_step=None):
    B, T, C = query.shape

    if batch_per_step is None:
        kind = ""
        try:
            kind = jax.devices()[0].device_kind.lower()
        except Exception:
            pass
        # v7x: 2 TensorCores/chip -> keep per-batch parallel grid (one element per core).
        # v5e/v6e: single TC -> fold the whole batch into one grid step.
        batch_per_step = 1 if "v7" in kind else B
    nb = max(1, min(int(batch_per_step), B))
    while B % nb != 0:
        nb -= 1
    R = nb * T

    proj, w1t, bff1, w2t, vecs = _pack_params(params)

    # block-diagonal causal keep-mask over the folded rows (within-batch causal only)
    tri = jnp.tril(jnp.ones((T, T), jnp.float32))
    keep_mask = jnp.kron(jnp.eye(nb, dtype=jnp.float32), tri)             # (R, R)

    # fold (B, T, C) -> (B*T, C) on the host (free reshape), tile nb*T rows per step
    k2 = key.reshape(B * T, C)
    q2 = query.reshape(B * T, C)
    v2 = value.reshape(B * T, C)

    def act_spec():
        return pl.BlockSpec((R, C), lambda b: (b, 0))

    def full_spec(arr):
        nd = arr.ndim
        return pl.BlockSpec(arr.shape, lambda b, _n=nd: (0,) * _n)

    out = pl.pallas_call(
        transformer_block_kernel,
        out_shape=jax.ShapeDtypeStruct((B * T, C), jnp.float32),
        grid_spec=pltpu.PrefetchScalarGridSpec(
            num_scalar_prefetch=0,
            grid=(B // nb,),
            in_specs=[act_spec(), act_spec(), act_spec(),
                      full_spec(keep_mask), full_spec(proj),
                      full_spec(w1t), full_spec(bff1), full_spec(w2t),
                      full_spec(vecs)],
            out_specs=pl.BlockSpec((R, C), lambda b: (b, 0)),
        ),
        compiler_params=pltpu.CompilerParams(
            dimension_semantics=("parallel",),
        ),
    )(k2, q2, v2, keep_mask, proj, w1t, bff1, w2t, vecs)

    return out.reshape(B, T, C)


# ---------------- deterministic parameter init (synthetic, PyTorch-like layout) ----------------
def init_params(rng):
    keys = jax.random.split(rng, 8)

    def linear_w(k, out_f, in_f):
        bound = 1.0 / math.sqrt(in_f)
        return jax.random.uniform(k, (out_f, in_f), jnp.float32, -bound, bound)

    def linear_b(k, out_f, in_f):
        bound = 1.0 / math.sqrt(in_f)
        return jax.random.uniform(k, (1, out_f), jnp.float32, -bound, bound)

    return {
        "wq": linear_w(keys[0], HEAD_DIM, HEAD_DIM),
        "wk": linear_w(keys[1], HEAD_DIM, HEAD_DIM),
        "wv": linear_w(keys[2], HEAD_DIM, HEAD_DIM),
        "wo": linear_w(keys[3], EMBED_DIM, EMBED_DIM),
        "bo": linear_b(keys[4], EMBED_DIM, EMBED_DIM),
        "g1": jnp.ones((1, EMBED_DIM), jnp.float32),
        "beta1": jnp.zeros((1, EMBED_DIM), jnp.float32),
        "w1": linear_w(keys[5], HIDDEN, EMBED_DIM),
        "bff1": linear_b(keys[6], HIDDEN, EMBED_DIM),
        "w2": linear_w(keys[7], EMBED_DIM, HIDDEN),
        "bff2": jnp.zeros((1, EMBED_DIM), jnp.float32),
        "g2": jnp.ones((1, EMBED_DIM), jnp.float32),
        "beta2": jnp.zeros((1, EMBED_DIM), jnp.float32),
    }


# ---------------- pure-JAX reference (mirrors the PyTorch forward exactly) ----------------
def reference(key, query, value, p):
    B, T, C = query.shape
    H, Dh = N_HEADS, HEAD_DIM
    k = key.reshape(B, T, H, Dh) @ p["wk"].T
    q = query.reshape(B, T, H, Dh) @ p["wq"].T
    v = value.reshape(B, T, H, Dh) @ p["wv"].T
    q, k, v = (x.transpose(0, 2, 1, 3) for x in (q, k, v))          # (B, H, T, Dh)
    prod = q @ k.transpose(0, 1, 3, 2)                              # (B, H, T, T)
    tril = jnp.tril(jnp.ones((T, T), jnp.float32))
    prod = jnp.where(tril == 0, -1e20, prod) / math.sqrt(Dh)
    scores = jax.nn.softmax(prod, axis=-1)
    out = (scores @ v).transpose(0, 2, 1, 3).reshape(B, T, C)
    attn = out @ p["wo"].T + p["bo"]
    resid1 = attn + value

    def ln(x, g, b):
        mu = x.mean(-1, keepdims=True)
        var = ((x - mu) ** 2).mean(-1, keepdims=True)
        return (x - mu) / jnp.sqrt(var + LN_EPS) * g + b

    norm1 = ln(resid1, p["g1"], p["beta1"])
    ff = jnp.maximum(norm1 @ p["w1"].T + p["bff1"], 0.0) @ p["w2"].T + p["bff2"]
    return ln(ff + norm1, p["g2"], p["beta2"])


if __name__ == "__main__":
    root = jax.random.PRNGKey(0)
    kk, kq, kv, kp = jax.random.split(root, 4)

    key = jax.random.normal(kk, (BATCH, SEQ, EMBED_DIM), jnp.float32)
    query = jax.random.normal(kq, (BATCH, SEQ, EMBED_DIM), jnp.float32)
    value = jax.random.normal(kv, (BATCH, SEQ, EMBED_DIM), jnp.float32)
    params = init_params(kp)

    # DecoderBlock forward: self-attention with key = query = value = x.
    out = transformer_block(key, query, value, params)
    out = jax.block_until_ready(out)

    ref = reference(key, query, value, params)
    assert out.shape == (BATCH, SEQ, EMBED_DIM)
    assert jnp.allclose(out, ref, atol=1e-4, rtol=1e-4), float(jnp.max(jnp.abs(out - ref)))

    print("KERNEL_OK")
</pallas_src>

<mosaic_0001>
module attributes {stable_mosaic.version = 11 : i64} {
  func.func @transformer_block_kernel(%arg0: i32, %arg1: memref<16x32xf32, #tpu.memory_space<vmem>>, %arg2: memref<16x32xf32, #tpu.memory_space<vmem>>, %arg3: memref<16x32xf32, #tpu.memory_space<vmem>>, %arg4: memref<16x16xf32, #tpu.memory_space<vmem>>, %arg5: memref<4x32x32xf32, #tpu.memory_space<vmem>>, %arg6: memref<32x128xf32, #tpu.memory_space<vmem>>, %arg7: memref<1x128xf32, #tpu.memory_space<vmem>>, %arg8: memref<128x32xf32, #tpu.memory_space<vmem>>, %arg9: memref<10x32xf32, #tpu.memory_space<vmem>>, %arg10: memref<16x32xf32, #tpu.memory_space<vmem>>) attributes {dimension_semantics = [#tpu.dimension_semantics<parallel>], iteration_bounds = array<i64: 1>, scalar_prefetch = 0 : i64, scratch_operands = 0 : i64, tpu.core_type = #tpu.core_type<tc>, window_params = [{transform_indices = @transform_0, window_bounds = array<i64: 16, 32>}, {transform_indices = @transform_1, window_bounds = array<i64: 16, 32>}, {transform_indices = @transform_2, window_bounds = array<i64: 16, 32>}, {pipeline_mode = #tpu.pipeline_mode<synchronous>, transform_indices = @transform_3, window_bounds = array<i64: 16, 16>}, {pipeline_mode = #tpu.pipeline_mode<synchronous>, transform_indices = @transform_4, window_bounds = array<i64: 4, 32, 32>}, {pipeline_mode = #tpu.pipeline_mode<synchronous>, transform_indices = @transform_5, window_bounds = array<i64: 32, 128>}, {pipeline_mode = #tpu.pipeline_mode<synchronous>, transform_indices = @transform_6, window_bounds = array<i64: 1, 128>}, {pipeline_mode = #tpu.pipeline_mode<synchronous>, transform_indices = @transform_7, window_bounds = array<i64: 128, 32>}, {pipeline_mode = #tpu.pipeline_mode<synchronous>, transform_indices = @transform_8, window_bounds = array<i64: 10, 32>}, {transform_indices = @transform_9, window_bounds = array<i64: 16, 32>}]} {
    %c0 = arith.constant 0 : index
    %c0_0 = arith.constant 0 : index
    %0 = vector.load %arg1[%c0, %c0_0] : memref<16x32xf32, #tpu.memory_space<vmem>>, vector<16x32xf32>
    %c0_1 = arith.constant 0 : index
    %c0_2 = arith.constant 0 : index
    %1 = vector.load %arg2[%c0_1, %c0_2] : memref<16x32xf32, #tpu.memory_space<vmem>>, vector<16x32xf32>
    %c0_3 = arith.constant 0 : index
    %c0_4 = arith.constant 0 : index
    %2 = vector.load %arg3[%c0_3, %c0_4] : memref<16x32xf32, #tpu.memory_space<vmem>>, vector<16x32xf32>
    %c0_5 = arith.constant 0 : index
    %c0_6 = arith.constant 0 : index
    %3 = vector.load %arg9[%c0_5, %c0_6] : memref<10x32xf32, #tpu.memory_space<vmem>>, vector<1x32xf32>
    %c1 = arith.constant 1 : index
    %c0_7 = arith.constant 0 : index
    %4 = vector.load %arg9[%c1, %c0_7] : memref<10x32xf32, #tpu.memory_space<vmem>>, vector<1x32xf32>
    %c2 = arith.constant 2 : index
    %c0_8 = arith.constant 0 : index
    %5 = vector.load %arg9[%c2, %c0_8] : memref<10x32xf32, #tpu.memory_space<vmem>>, vector<1x32xf32>
    %c3 = arith.constant 3 : index
    %c0_9 = arith.constant 0 : index
    %6 = vector.load %arg9[%c3, %c0_9] : memref<10x32xf32, #tpu.memory_space<vmem>>, vector<1x32xf32>
    %c4 = arith.constant 4 : index
    %c0_10 = arith.constant 0 : index
    %7 = vector.load %arg9[%c4, %c0_10] : memref<10x32xf32, #tpu.memory_space<vmem>>, vector<1x32xf32>
    %c5 = arith.constant 5 : index
    %c0_11 = arith.constant 0 : index
    %8 = vector.load %arg9[%c5, %c0_11] : memref<10x32xf32, #tpu.memory_space<vmem>>, vector<1x32xf32>
    %c0_12 = arith.constant 0 : index
    %c0_13 = arith.constant 0 : index
    %c0_14 = arith.constant 0 : index
    %9 = vector.load %arg5[%c0_12, %c0_13, %c0_14] : memref<4x32x32xf32, #tpu.memory_space<vmem>>, vector<1x32x32xf32>
    %10 = vector.shape_cast %9 : vector<1x32x32xf32> to vector<32x32xf32>
    %cst = arith.constant dense<0.000000e+00> : vector<16x32xf32>
    %11 = tpu.matmul %1, %10, %cst {dimension_numbers = #tpu.dot_dimension_numbers<[1], [0], [0], [1], [0, 0, 1, 1], [], []>} : vector<16x32xf32>, vector<32x32xf32>, vector<16x32xf32> -> vector<16x32xf32>
    %c1_15 = arith.constant 1 : index
    %c0_16 = arith.constant 0 : index
    %c0_17 = arith.constant 0 : index
    %12 = vector.load %arg5[%c1_15, %c0_16, %c0_17] : memref<4x32x32xf32, #tpu.memory_space<vmem>>, vector<1x32x32xf32>
    %13 = vector.shape_cast %12 : vector<1x32x32xf32> to vector<32x32xf32>
    %cst_18 = arith.constant dense<0.000000e+00> : vector<16x32xf32>
    %14 = tpu.matmul %0, %13, %cst_18 {dimension_numbers = #tpu.dot_dimension_numbers<[1], [0], [0], [1], [0, 0, 1, 1], [], []>} : vector<16x32xf32>, vector<32x32xf32>, vector<16x32xf32> -> vector<16x32xf32>
    %c2_19 = arith.constant 2 : index
    %c0_20 = arith.constant 0 : index
    %c0_21 = arith.constant 0 : index
    %15 = vector.load %arg5[%c2_19, %c0_20, %c0_21] : memref<4x32x32xf32, #tpu.memory_space<vmem>>, vector<1x32x32xf32>
    %16 = vector.shape_cast %15 : vector<1x32x32xf32> to vector<32x32xf32>
    %cst_22 = arith.constant dense<0.000000e+00> : vector<16x32xf32>
    %17 = tpu.matmul %2, %16, %cst_22 {dimension_numbers = #tpu.dot_dimension_numbers<[1], [0], [0], [1], [0, 0, 1, 1], [], []>} : vector<16x32xf32>, vector<32x32xf32>, vector<16x32xf32> -> vector<16x32xf32>
    %18 = tpu.transpose %14, [1, 0] : vector<16x32xf32> -> vector<32x16xf32>
    %c0_23 = arith.constant 0 : index
    %c0_24 = arith.constant 0 : index
    %19 = vector.load %arg4[%c0_23, %c0_24] : memref<16x16xf32, #tpu.memory_space<vmem>>, vector<16x16xf32>
    %cst_25 = arith.constant 5.000000e-01 : f32
    %20 = vector.broadcast %cst_25 : f32 to vector<16x16xf32>
    %21 = arith.cmpf ogt, %19, %20 : vector<16x16xf32>
    %c6 = arith.constant 6 : index
    %c0_26 = arith.constant 0 : index
    %22 = vector.load %arg9[%c6, %c0_26] : memref<10x32xf32, #tpu.memory_space<vmem>>, vector<1x32xf32>
    %23 = vector.broadcast %22 : vector<1x32xf32> to vector<16x32xf32>
    %24 = arith.mulf %11, %23 : vector<16x32xf32>
    %cst_27 = arith.constant dense<0.000000e+00> : vector<16x16xf32>
    %25 = tpu.matmul %24, %18, %cst_27 {dimension_numbers = #tpu.dot_dimension_numbers<[1], [0], [0], [1], [0, 0, 1, 1], [], []>} : vector<16x32xf32>, vector<32x16xf32>, vector<16x16xf32> -> vector<16x16xf32>
    %cst_28 = arith.constant -1.000000e+20 : f32
    %26 = vector.broadcast %cst_28 : f32 to vector<16x16xf32>
    %27 = arith.select %21, %25, %26 : vector<16x16xi1>, vector<16x16xf32>
    %cst_29 = arith.constant 0.353553385 : f32
    %28 = vector.broadcast %cst_29 : f32 to vector<16x16xf32>
    %29 = arith.mulf %27, %28 : vector<16x16xf32>
    %cst_30 = arith.constant dense<0xFF800000> : vector<16xf32>
    %30 = vector.multi_reduction <maximumf>, %29, %cst_30 [1] : vector<16x16xf32> to vector<16xf32>
    %31 = vector.shape_cast %30 : vector<16xf32> to vector<16x1xf32>
    %32 = vector.broadcast %31 : vector<16x1xf32> to vector<16x16xf32>
    %33 = arith.subf %29, %32 : vector<16x16xf32>
    %34 = math.exp %33 : vector<16x16xf32>
    %cst_31 = arith.constant dense<0.000000e+00> : vector<16xf32>
    %35 = vector.multi_reduction <add>, %34, %cst_31 [1] : vector<16x16xf32> to vector<16xf32>
    %36 = vector.shape_cast %35 : vector<16xf32> to vector<16x1xf32>
    %37 = tpu.reciprocal %36 : vector<16x1xf32> -> vector<16x1xf32>
    %38 = vector.broadcast %37 : vector<16x1xf32> to vector<16x16xf32>
    %39 = arith.mulf %34, %38 : vector<16x16xf32>
    %40 = vector.broadcast %22 : vector<1x32xf32> to vector<16x32xf32>
    %41 = arith.mulf %17, %40 : vector<16x32xf32>
    %cst_32 = arith.constant dense<0.000000e+00> : vector<16x32xf32>
    %42 = tpu.matmul %39, %41, %cst_32 {dimension_numbers = #tpu.dot_dimension_numbers<[1], [0], [0], [1], [0, 0, 1, 1], [], []>} : vector<16x16xf32>, vector<16x32xf32>, vector<16x32xf32> -> vector<16x32xf32>
    %c7 = arith.constant 7 : index
    %c0_33 = arith.constant 0 : index
    %43 = vector.load %arg9[%c7, %c0_33] : memref<10x32xf32, #tpu.memory_space<vmem>>, vector<1x32xf32>
    %44 = vector.broadcast %43 : vector<1x32xf32> to vector<16x32xf32>
    %45 = arith.mulf %11, %44 : vector<16x32xf32>
    %cst_34 = arith.constant dense<0.000000e+00> : vector<16x16xf32>
    %46 = tpu.matmul %45, %18, %cst_34 {dimension_numbers = #tpu.dot_dimension_numbers<[1], [0], [0], [1], [0, 0, 1, 1], [], []>} : vector<16x32xf32>, vector<32x16xf32>, vector<16x16xf32> -> vector<16x16xf32>
    %cst_35 = arith.constant -1.000000e+20 : f32
    %47 = vector.broadcast %cst_35 : f32 to vector<16x16xf32>
    %48 = arith.select %21, %46, %47 : vector<16x16xi1>, vector<16x16xf32>
    %cst_36 = arith.constant 0.353553385 : f32
    %49 = vector.broadcast %cst_36 : f32 to vector<16x16xf32>
    %50 = arith.mulf %48, %49 : vector<16x16xf32>
    %cst_37 = arith.constant dense<0xFF800000> : vector<16xf32>
    %51 = vector.multi_reduction <maximumf>, %50, %cst_37 [1] : vector<16x16xf32> to vector<16xf32>
    %52 = vector.shape_cast %51 : vector<16xf32> to vector<16x1xf32>
    %53 = vector.broadcast %52 : vector<16x1xf32> to vector<16x16xf32>
    %54 = arith.subf %50, %53 : vector<16x16xf32>
    %55 = math.exp %54 : vector<16x16xf32>
    %cst_38 = arith.constant dense<0.000000e+00> : vector<16xf32>
    %56 = vector.multi_reduction <add>, %55, %cst_38 [1] : vector<16x16xf32> to vector<16xf32>
    %57 = vector.shape_cast %56 : vector<16xf32> to vector<16x1xf32>
    %58 = tpu.reciprocal %57 : vector<16x1xf32> -> vector<16x1xf32>
    %59 = vector.broadcast %58 : vector<16x1xf32> to vector<16x16xf32>
    %60 = arith.mulf %55, %59 : vector<16x16xf32>
    %61 = vector.broadcast %43 : vector<1x32xf32> to vector<16x32xf32>
    %62 = arith.mulf %17, %61 : vector<16x32xf32>
    %cst_39 = arith.constant dense<0.000000e+00> : vector<16x32xf32>
    %63 = tpu.matmul %60, %62, %cst_39 {dimension_numbers = #tpu.dot_dimension_numbers<[1], [0], [0], [1], [0, 0, 1, 1], [], []>} : vector<16x16xf32>, vector<16x32xf32>, vector<16x32xf32> -> vector<16x32xf32>
    %64 = arith.addf %42, %63 : vector<16x32xf32>
    %c8 = arith.constant 8 : index
    %c0_40 = arith.constant 0 : index
    %65 = vector.load %arg9[%c8, %c0_40] : memref<10x32xf32, #tpu.memory_space<vmem>>, vector<1x32xf32>
    %66 = vector.broadcast %65 : vector<1x32xf32> to vector<16x32xf32>
    %67 = arith.mulf %11, %66 : vector<16x32xf32>
    %cst_41 = arith.constant dense<0.000000e+00> : vector<16x16xf32>
    %68 = tpu.matmul %67, %18, %cst_41 {dimension_numbers = #tpu.dot_dimension_numbers<[1], [0], [0], [1], [0, 0, 1, 1], [], []>} : vector<16x32xf32>, vector<32x16xf32>, vector<16x16xf32> -> vector<16x16xf32>
    %cst_42 = arith.constant -1.000000e+20 : f32
    %69 = vector.broadcast %cst_42 : f32 to vector<16x16xf32>
    %70 = arith.select %21, %68, %69 : vector<16x16xi1>, vector<16x16xf32>
    %cst_43 = arith.constant 0.353553385 : f32
    %71 = vector.broadcast %cst_43 : f32 to vector<16x16xf32>
    %72 = arith.mulf %70, %71 : vector<16x16xf32>
    %cst_44 = arith.constant dense<0xFF800000> : vector<16xf32>
    %73 = vector.multi_reduction <maximumf>, %72, %cst_44 [1] : vector<16x16xf32> to vector<16xf32>
    %74 = vector.shape_cast %73 : vector<16xf32> to vector<16x1xf32>
    %75 = vector.broadcast %74 : vector<16x1xf32> to vector<16x16xf32>
    %76 = arith.subf %72, %75 : vector<16x16xf32>
    %77 = math.exp %76 : vector<16x16xf32>
    %cst_45 = arith.constant dense<0.000000e+00> : vector<16xf32>
    %78 = vector.multi_reduction <add>, %77, %cst_45 [1] : vector<16x16xf32> to vector<16xf32>
    %79 = vector.shape_cast %78 : vector<16xf32> to vector<16x1xf32>
    %80 = tpu.reciprocal %79 : vector<16x1xf32> -> vector<16x1xf32>
    %81 = vector.broadcast %80 : vector<16x1xf32> to vector<16x16xf32>
    %82 = arith.mulf %77, %81 : vector<16x16xf32>
    %83 = vector.broadcast %65 : vector<1x32xf32> to vector<16x32xf32>
    %84 = arith.mulf %17, %83 : vector<16x32xf32>
    %cst_46 = arith.constant dense<0.000000e+00> : vector<16x32xf32>
    %85 = tpu.matmul %82, %84, %cst_46 {dimension_numbers = #tpu.dot_dimension_numbers<[1], [0], [0], [1], [0, 0, 1, 1], [], []>} : vector<16x16xf32>, vector<16x32xf32>, vector<16x32xf32> -> vector<16x32xf32>
    %86 = arith.addf %64, %85 : vector<16x32xf32>
    %c9 = arith.constant 9 : index
    %c0_47 = arith.constant 0 : index
    %87 = vector.load %arg9[%c9, %c0_47] : memref<10x32xf32, #tpu.memory_space<vmem>>, vector<1x32xf32>
    %88 = vector.broadcast %87 : vector<1x32xf32> to vector<16x32xf32>
    %89 = arith.mulf %11, %88 : vector<16x32xf32>
    %cst_48 = arith.constant dense<0.000000e+00> : vector<16x16xf32>
    %90 = tpu.matmul %89, %18, %cst_48 {dimension_numbers = #tpu.dot_dimension_numbers<[1], [0], [0], [1], [0, 0, 1, 1], [], []>} : vector<16x32xf32>, vector<32x16xf32>, vector<16x16xf32> -> vector<16x16xf32>
    %cst_49 = arith.constant -1.000000e+20 : f32
    %91 = vector.broadcast %cst_49 : f32 to vector<16x16xf32>
    %92 = arith.select %21, %90, %91 : vector<16x16xi1>, vector<16x16xf32>
    %cst_50 = arith.constant 0.353553385 : f32
    %93 = vector.broadcast %cst_50 : f32 to vector<16x16xf32>
    %94 = arith.mulf %92, %93 : vector<16x16xf32>
    %cst_51 = arith.constant dense<0xFF800000> : vector<16xf32>
    %95 = vector.multi_reduction <maximumf>, %94, %cst_51 [1] : vector<16x16xf32> to vector<16xf32>
    %96 = vector.shape_cast %95 : vector<16xf32> to vector<16x1xf32>
    %97 = vector.broadcast %96 : vector<16x1xf32> to vector<16x16xf32>
    %98 = arith.subf %94, %97 : vector<16x16xf32>
    %99 = math.exp %98 : vector<16x16xf32>
    %cst_52 = arith.constant dense<0.000000e+00> : vector<16xf32>
    %100 = vector.multi_reduction <add>, %99, %cst_52 [1] : vector<16x16xf32> to vector<16xf32>
    %101 = vector.shape_cast %100 : vector<16xf32> to vector<16x1xf32>
    %102 = tpu.reciprocal %101 : vector<16x1xf32> -> vector<16x1xf32>
    %103 = vector.broadcast %102 : vector<16x1xf32> to vector<16x16xf32>
    %104 = arith.mulf %99, %103 : vector<16x16xf32>
    %105 = vector.broadcast %87 : vector<1x32xf32> to vector<16x32xf32>
    %106 = arith.mulf %17, %105 : vector<16x32xf32>
    %cst_53 = arith.constant dense<0.000000e+00> : vector<16x32xf32>
    %107 = tpu.matmul %104, %106, %cst_53 {dimension_numbers = #tpu.dot_dimension_numbers<[1], [0], [0], [1], [0, 0, 1, 1], [], []>} : vector<16x16xf32>, vector<16x32xf32>, vector<16x32xf32> -> vector<16x32xf32>
    %108 = arith.addf %86, %107 : vector<16x32xf32>
    %c3_54 = arith.constant 3 : index
    %c0_55 = arith.constant 0 : index
    %c0_56 = arith.constant 0 : index
    %109 = vector.load %arg5[%c3_54, %c0_55, %c0_56] : memref<4x32x32xf32, #tpu.memory_space<vmem>>, vector<1x32x32xf32>
    %110 = vector.shape_cast %109 : vector<1x32x32xf32> to vector<32x32xf32>
    %cst_57 = arith.constant dense<0.000000e+00> : vector<16x32xf32>
    %111 = tpu.matmul %108, %110, %cst_57 {dimension_numbers = #tpu.dot_dimension_numbers<[1], [0], [0], [1], [0, 0, 1, 1], [], []>} : vector<16x32xf32>, vector<32x32xf32>, vector<16x32xf32> -> vector<16x32xf32>
    %112 = vector.broadcast %3 : vector<1x32xf32> to vector<16x32xf32>
    %113 = arith.addf %111, %112 : vector<16x32xf32>
    %114 = arith.addf %113, %2 : vector<16x32xf32>
    %cst_58 = arith.constant dense<0.000000e+00> : vector<16xf32>
    %115 = vector.multi_reduction <add>, %114, %cst_58 [1] : vector<16x32xf32> to vector<16xf32>
    %116 = vector.shape_cast %115 : vector<16xf32> to vector<16x1xf32>
    %cst_59 = arith.constant 3.200000e+01 : f32
    %117 = vector.broadcast %cst_59 : f32 to vector<16x1xf32>
    %118 = arith.divf %116, %117 : vector<16x1xf32>
    %119 = vector.broadcast %118 : vector<16x1xf32> to vector<16x32xf32>
    %120 = arith.subf %114, %119 : vector<16x32xf32>
    %121 = arith.mulf %120, %120 : vector<16x32xf32>
    %cst_60 = arith.constant dense<0.000000e+00> : vector<16xf32>
    %122 = vector.multi_reduction <add>, %121, %cst_60 [1] : vector<16x32xf32> to vector<16xf32>
    %123 = vector.shape_cast %122 : vector<16xf32> to vector<16x1xf32>
    %cst_61 = arith.constant 3.200000e+01 : f32
    %124 = vector.broadcast %cst_61 : f32 to vector<16x1xf32>
    %125 = arith.divf %123, %124 : vector<16x1xf32>
    %126 = vector.broadcast %118 : vector<16x1xf32> to vector<16x32xf32>
    %127 = arith.subf %114, %126 : vector<16x32xf32>
    %cst_62 = arith.constant 9.99999974E-6 : f32
    %128 = vector.broadcast %cst_62 : f32 to vector<16x1xf32>
    %129 = arith.addf %125, %128 : vector<16x1xf32>
    %130 = math.rsqrt %129 : vector<16x1xf32>
    %131 = vector.broadcast %130 : vector<16x1xf32> to vector<16x32xf32>
    %132 = arith.mulf %127, %131 : vector<16x32xf32>
    %133 = vector.broadcast %4 : vector<1x32xf32> to vector<16x32xf32>
    %134 = arith.mulf %132, %133 : vector<16x32xf32>
    %135 = vector.broadcast %5 : vector<1x32xf32> to vector<16x32xf32>
    %136 = arith.addf %134, %135 : vector<16x32xf32>
    %c0_63 = arith.constant 0 : index
    %c0_64 = arith.constant 0 : index
    %137 = vector.load %arg6[%c0_63, %c0_64] : memref<32x128xf32, #tpu.memory_space<vmem>>, vector<32x128xf32>
    %cst_65 = arith.constant dense<0.000000e+00> : vector<16x128xf32>
    %138 = tpu.matmul %136, %137, %cst_65 {dimension_numbers = #tpu.dot_dimension_numbers<[1], [0], [0], [1], [0, 0, 1, 1], [], []>} : vector<16x32xf32>, vector<32x128xf32>, vector<16x128xf32> -> vector<16x128xf32>
    %c0_66 = arith.constant 0 : index
    %c0_67 = arith.constant 0 : index
    %139 = vector.load %arg7[%c0_66, %c0_67] : memref<1x128xf32, #tpu.memory_space<vmem>>, vector<1x128xf32>
    %140 = vector.broadcast %139 : vector<1x128xf32> to vector<16x128xf32>
    %141 = arith.addf %138, %140 : vector<16x128xf32>
    %cst_68 = arith.constant 0.000000e+00 : f32
    %142 = vector.broadcast %cst_68 : f32 to vector<16x128xf32>
    %143 = arith.maximumf %141, %142 : vector<16x128xf32>
    %c0_69 = arith.constant 0 : index
    %c0_70 = arith.constant 0 : index
    %144 = vector.load %arg8[%c0_69, %c0_70] : memref<128x32xf32, #tpu.memory_space<vmem>>, vector<128x32xf32>
    %cst_71 = arith.constant dense<0.000000e+00> : vector<16x32xf32>
    %145 = tpu.matmul %143, %144, %cst_71 {dimension_numbers = #tpu.dot_dimension_numbers<[1], [0], [0], [1], [0, 0, 1, 1], [], []>} : vector<16x128xf32>, vector<128x32xf32>, vector<16x32xf32> -> vector<16x32xf32>
    %146 = vector.broadcast %6 : vector<1x32xf32> to vector<16x32xf32>
    %147 = arith.addf %145, %146 : vector<16x32xf32>
    %148 = arith.addf %147, %136 : vector<16x32xf32>
    %cst_72 = arith.constant dense<0.000000e+00> : vector<16xf32>
    %149 = vector.multi_reduction <add>, %148, %cst_72 [1] : vector<16x32xf32> to vector<16xf32>
    %150 = vector.shape_cast %149 : vector<16xf32> to vector<16x1xf32>
    %cst_73 = arith.constant 3.200000e+01 : f32
    %151 = vector.broadcast %cst_73 : f32 to vector<16x1xf32>
    %152 = arith.divf %150, %151 : vector<16x1xf32>
    %153 = vector.broadcast %152 : vector<16x1xf32> to vector<16x32xf32>
    %154 = arith.subf %148, %153 : vector<16x32xf32>
    %155 = arith.mulf %154, %154 : vector<16x32xf32>
    %cst_74 = arith.constant dense<0.000000e+00> : vector<16xf32>
    %156 = vector.multi_reduction <add>, %155, %cst_74 [1] : vector<16x32xf32> to vector<16xf32>
    %157 = vector.shape_cast %156 : vector<16xf32> to vector<16x1xf32>
    %cst_75 = arith.constant 3.200000e+01 : f32
    %158 = vector.broadcast %cst_75 : f32 to vector<16x1xf32>
    %159 = arith.divf %157, %158 : vector<16x1xf32>
    %160 = vector.broadcast %152 : vector<16x1xf32> to vector<16x32xf32>
    %161 = arith.subf %148, %160 : vector<16x32xf32>
    %cst_76 = arith.constant 9.99999974E-6 : f32
    %162 = vector.broadcast %cst_76 : f32 to vector<16x1xf32>
    %163 = arith.addf %159, %162 : vector<16x1xf32>
    %164 = math.rsqrt %163 : vector<16x1xf32>
    %165 = vector.broadcast %164 : vector<16x1xf32> to vector<16x32xf32>
    %166 = arith.mulf %161, %165 : vector<16x32xf32>
    %167 = vector.broadcast %7 : vector<1x32xf32> to vector<16x32xf32>
    %168 = arith.mulf %166, %167 : vector<16x32xf32>
    %169 = vector.broadcast %8 : vector<1x32xf32> to vector<16x32xf32>
    %170 = arith.addf %168, %169 : vector<16x32xf32>
    %c0_77 = arith.constant 0 : index
    %c0_78 = arith.constant 0 : index
    %171 = vector.load %arg10[%c0_77, %c0_78] : memref<16x32xf32, #tpu.memory_space<vmem>>, vector<16x32xf32>
    tpu.vector_store %arg10[%c0_77, %c0_78], %170 {strides = array<i32>} : memref<16x32xf32, #tpu.memory_space<vmem>>, vector<16x32xf32>,
    return
  }
  func.func @transform_0(%arg0: i32) -> (i32, i32) {
    %c0_i32 = arith.constant 0 : i32
    %c0_i32_0 = arith.constant 0 : i32
    return %arg0, %c0_i32 : i32, i32
  }
  func.func @transform_1(%arg0: i32) -> (i32, i32) {
    %c0_i32 = arith.constant 0 : i32
    %c0_i32_0 = arith.constant 0 : i32
    return %arg0, %c0_i32 : i32, i32
  }
  func.func @transform_2(%arg0: i32) -> (i32, i32) {
    %c0_i32 = arith.constant 0 : i32
    %c0_i32_0 = arith.constant 0 : i32
    return %arg0, %c0_i32 : i32, i32
  }
  func.func @transform_3(%arg0: i32) -> (i32, i32) {
    %c0_i32 = arith.constant 0 : i32
    %c0_i32_0 = arith.constant 0 : i32
    %c0_i32_1 = arith.constant 0 : i32
    return %c0_i32, %c0_i32_0 : i32, i32
  }
  func.func @transform_4(%arg0: i32) -> (i32, i32, i32) {
    %c0_i32 = arith.constant 0 : i32
    %c0_i32_0 = arith.constant 0 : i32
    %c0_i32_1 = arith.constant 0 : i32
    %c0_i32_2 = arith.constant 0 : i32
    return %c0_i32, %c0_i32_0, %c0_i32_1 : i32, i32, i32
  }
  func.func @transform_5(%arg0: i32) -> (i32, i32) {
    %c0_i32 = arith.constant 0 : i32
    %c0_i32_0 = arith.constant 0 : i32
    %c0_i32_1 = arith.constant 0 : i32
    return %c0_i32, %c0_i32_0 : i32, i32
  }
  func.func @transform_6(%arg0: i32) -> (i32, i32) {
    %c0_i32 = arith.constant 0 : i32
    %c0_i32_0 = arith.constant 0 : i32
    %c0_i32_1 = arith.constant 0 : i32
    return %c0_i32, %c0_i32_0 : i32, i32
  }
  func.func @transform_7(%arg0: i32) -> (i32, i32) {
    %c0_i32 = arith.constant 0 : i32
    %c0_i32_0 = arith.constant 0 : i32
    %c0_i32_1 = arith.constant 0 : i32
    return %c0_i32, %c0_i32_0 : i32, i32
  }
  func.func @transform_8(%arg0: i32) -> (i32, i32) {
    %c0_i32 = arith.constant 0 : i32
    %c0_i32_0 = arith.constant 0 : i32
    %c0_i32_1 = arith.constant 0 : i32
    return %c0_i32, %c0_i32_0 : i32, i32
  }
  func.func @transform_9(%arg0: i32) -> (i32, i32) {
    %c0_i32 = arith.constant 0 : i32
    %c0_i32_0 = arith.constant 0 : i32
    return %arg0, %c0_i32 : i32, i32
  }
}

</mosaic_0001>

<llo_original>
// kernel: tpu_custom_call.1
$region0: #{tpu_custom_call.1}
  #allocation0 [shape = 'u32[]', space=smem, size = 0x4, offset = 0x4, fixed_abs, tag = 'smem constant byte address 0x4 - core index']
  #allocation1 [shape = 'u32[144,128]{1,0:T(1,128)}', space=vmem, size = 0x12000, scoped, tag = 'internal scratch']
  %s0 = inlined_call_operand.hbm [shape: f32[16,32], index: 0, kind: input, shape index: {}]
  %s1 = inlined_call_operand.hbm [shape: f32[16,32], index: 1, kind: input, shape index: {}]
  %s2 = inlined_call_operand.hbm [shape: f32[16,32], index: 2, kind: input, shape index: {}]
  %s3 = inlined_call_operand.hbm [shape: f32[16,16], index: 3, kind: input, shape index: {}]
  %s4 = inlined_call_operand.vmem [shape: f32[4,32,32], index: 4, kind: input, shape index: {}]
  %s5 = inlined_call_operand.vmem [shape: f32[32,128], index: 5, kind: input, shape index: {}]
  %s6 = inlined_call_operand.vmem [shape: f32[1,128], index: 6, kind: input, shape index: {}]
  %s7 = inlined_call_operand.vmem [shape: f32[128,32], index: 7, kind: input, shape index: {}]
  %s8 = inlined_call_operand.vmem [shape: f32[10,32], index: 8, kind: input, shape index: {}]
  %s9 = inlined_call_operand.hbm [shape: f32[16,32], index: 9, kind: output, shape index: {}]
  %s10 = sld [smem:[#allocation0]]
  $region62: #{tpu_custom_call.1} parent=0
    _
  %s12 = ssub.s32 1, %s10
  %s13 = scalar_select 0, %s12, %s10
  $region1: #{tpu_custom_call.1} parent=0
    #allocation2 [shape = 'u8[8192]{0}', space=vmem, size = 0x2000, scoped, tag = 'input window, operand 0, single buffered']
    #allocation3 [shape = 's32[1]{0}', space=sflag, size = 0x4, scoped, tag = 'scoped memory for tpu_custom_call.1']
    #allocation4 [shape = 's32[1]{0}', space=sflag, size = 0x4, scoped, tag = 'scoped memory for tpu_custom_call.1']
    #allocation5 [shape = 'u8[8192]{0}', space=vmem, size = 0x2000, scoped, tag = 'input window, operand 1, single buffered']
    #allocation6 [shape = 's32[1]{0}', space=sflag, size = 0x4, scoped, tag = 'scoped memory for tpu_custom_call.1']
    #allocation7 [shape = 'u8[8192]{0}', space=vmem, size = 0x2000, scoped, tag = 'input window, operand 2, single buffered']
    #allocation8 [shape = 'u8[8192]{0}', space=vmem, size = 0x2000, scoped, tag = 'input window, operand 3, single buffered']
    #allocation9 [shape = 's32[1]{0}', space=sflag, size = 0x4, scoped, tag = 'scoped memory for tpu_custom_call.1']
    #allocation10 [shape = 'u8[8192]{0}', space=vmem, size = 0x2000, scoped, tag = 'output window, operand 0, single buffered']
    %14 = vsyncpa [#allocation3], 0
    %15 = vsyncpa [#allocation6], 0
    %16 = vsyncpa [#allocation9], 0
    %17 = vsyncpa [#allocation4], 0
    // Predicated region
    $region2: #{tpu_custom_call.1} parent=1 // pred_check
      _
    $region3: #{tpu_custom_call.1} parent=1 // pred_check_branch
      %19 = sbr.rel (0) target = $region5
    $region4: #{tpu_custom_call.1} parent=1 // pred_region
      %s21 = ssub.s32 256, 256
      %22 = vsyncadd [#allocation3], %s21
      %s23 = sshll.u32 [#allocation2], 4
      %s24 = int_to_ptr.vmem [resolvable:$true] %s23
      %29 = dma.hbm_to_vmem [thread:$0]  %s0, 256, %s24, [#allocation3], 128, 128, 8
    $region5: #{tpu_custom_call.1} parent=1 // pred_fallthru
      _
    // Predicated region
    $region6: #{tpu_custom_call.1} parent=1 // pred_check
      _
    $region7: #{tpu_custom_call.1} parent=1 // pred_check_branch
      %31 = sbr.rel (0) target = $region9
    $region8: #{tpu_custom_call.1} parent=1 // pred_region
      %s33 = ssub.s32 256, 256
      %34 = vsyncadd [#allocation6], %s33
      %s35 = sshll.u32 [#allocation5], 4
      %s36 = int_to_ptr.vmem [resolvable:$true] %s35
      %41 = dma.hbm_to_vmem [thread:$0]  %s1, 256, %s36, [#allocation6], 128, 128, 8
    $region9: #{tpu_custom_call.1} parent=1 // pred_fallthru
      _
    // Predicated region
    $region10: #{tpu_custom_call.1} parent=1 // pred_check
      _
    $region11: #{tpu_custom_call.1} parent=1 // pred_check_branch
      %43 = sbr.rel (0) target = $region13
    $region12: #{tpu_custom_call.1} parent=1 // pred_region
      %s45 = ssub.s32 256, 256
      %46 = vsyncadd [#allocation6], %s45
      %s47 = sshll.u32 [#allocation7], 4
      %s48 = int_to_ptr.vmem [resolvable:$true] %s47
      %53 = dma.hbm_to_vmem [thread:$0]  %s2, 256, %s48, [#allocation6], 128, 128, 8
    $region13: #{tpu_custom_call.1} parent=1 // pred_fallthru
      _
    // Predicated region
    $region14: #{tpu_custom_call.1} parent=1 // pred_check
      _
    $region15: #{tpu_custom_call.1} parent=1 // pred_check_branch
      %55 = sbr.rel (0) target = $region17
    $region16: #{tpu_custom_call.1} parent=1 // pred_region
      %s57 = ssub.s32 256, 256
      %58 = vsyncadd [#allocation9], %s57
      %s59 = sshll.u32 [#allocation8], 4
      %s60 = int_to_ptr.vmem [resolvable:$true] %s59
      %65 = dma.hbm_to_vmem [thread:$0]  %s3, 256, %s60, [#allocation9], 128, 128, 8
    $region17: #{tpu_custom_call.1} parent=1 // pred_fallthru
      _
    // Predicated region
    $region18: #{tpu_custom_call.1} parent=1 // pred_check
      _
    $region19: #{tpu_custom_call.1} parent=1 // pred_check_branch
      %67 = sbr.rel (0) target = $region21
    $region20: #{tpu_custom_call.1} parent=1 // pred_region
      _
    $region21: #{tpu_custom_call.1} parent=1 // pred_fallthru
      _
    // Predicated region
    $region22: #{tpu_custom_call.1} parent=1 // pred_check
      _
    $region23: #{tpu_custom_call.1} parent=1 // pred_check_branch
      %69 = sbr.rel (0) target = $region25
    $region24: #{tpu_custom_call.1} parent=1 // pred_region
      _
    $region25: #{tpu_custom_call.1} parent=1 // pred_fallthru
      _
    // Predicated region
    $region26: #{tpu_custom_call.1} parent=1 // pred_check
      _
    $region27: #{tpu_custom_call.1} parent=1 // pred_check_branch
      %71 = sbr.rel (0) target = $region29
    $region28: #{tpu_custom_call.1} parent=1 // pred_region
      _
    $region29: #{tpu_custom_call.1} parent=1 // pred_fallthru
      _
    // Predicated region
    $region30: #{tpu_custom_call.1} parent=1 // pred_check
      _
    $region31: #{tpu_custom_call.1} parent=1 // pred_check_branch
      %73 = sbr.rel (0) target = $region33
    $region32: #{tpu_custom_call.1} parent=1 // pred_region
      _
    $region33: #{tpu_custom_call.1} parent=1 // pred_fallthru
      _
    // Predicated region
    $region34: #{tpu_custom_call.1} parent=1 // pred_check
      _
    $region35: #{tpu_custom_call.1} parent=1 // pred_check_branch
      %75 = sbr.rel (0) target = $region37
    $region36: #{tpu_custom_call.1} parent=1 // pred_region
      _
    $region37: #{tpu_custom_call.1} parent=1 // pred_fallthru
      _
    // Predicated region
    $region38: #{tpu_custom_call.1} parent=1 // pred_check
      _
    $region39: #{tpu_custom_call.1} parent=1 // pred_check_branch
      %77 = sbr.rel (0) target = $region41
    $region40: #{tpu_custom_call.1} parent=1 // pred_region
      %78 = dma.done [#allocation3], 256
    $region41: #{tpu_custom_call.1} parent=1 // pred_fallthru
      _
    // Predicated region
    $region42: #{tpu_custom_call.1} parent=1 // pred_check
      _
    $region43: #{tpu_custom_call.1} parent=1 // pred_check_branch
      %80 = sbr.rel (0) target = $region45
    $region44: #{tpu_custom_call.1} parent=1 // pred_region
      %81 = dma.done [#allocation6], 256
    $region45: #{tpu_custom_call.1} parent=1 // pred_fallthru
      _
    // Predicated region
    $region46: #{tpu_custom_call.1} parent=1 // pred_check
      _
    $region47: #{tpu_custom_call.1} parent=1 // pred_check_branch
      %83 = sbr.rel (0) target = $region49
    $region48: #{tpu_custom_call.1} parent=1 // pred_region
      %84 = dma.done [#allocation6], 256
    $region49: #{tpu_custom_call.1} parent=1 // pred_fallthru
      _
    // Predicated region
    $region50: #{tpu_custom_call.1} parent=1 // pred_check
      _
    $region51: #{tpu_custom_call.1} parent=1 // pred_check_branch
      %86 = sbr.rel (0) target = $region53
    $region52: #{tpu_custom_call.1} parent=1 // pred_region
      %87 = dma.done [#allocation9], 256
    $region53: #{tpu_custom_call.1} parent=1 // pred_fallthru
      _
    %v88 = vld [vmem:[#allocation2] sm:$0xff]
    %v89 = vld [vmem:[#allocation2 + $0x8] sm:$0xff]
    %v90 = vld [vmem:[#allocation5] sm:$0xff]
    %v91 = vld [vmem:[#allocation5 + $0x8] sm:$0xff]
    %v92 = vld [vmem:[#allocation7] sm:$0xff]
    %v93 = vld [vmem:[#allocation7 + $0x8] sm:$0xff]
    %v94 = vld [vmem:[%s8] sm:$0x1]
    %v95 = vld [vmem:[%s8 + $0x1] sm:$0x1]
    %v96 = vld [vmem:[%s8 + $0x2] sm:$0x1]
    %v97 = vld [vmem:[%s8 + $0x3] sm:$0x1]
    %v98 = vld [vmem:[%s8 + $0x4] sm:$0x1]
    %v99 = vld [vmem:[%s8 + $0x5] sm:$0x1]
    %v100 = vld [vmem:[%s4] sm:$0xff]
    %v101 = vld [vmem:[%s4 + $0x8] sm:$0xff]
    %v102 = vld [vmem:[%s4 + $0x10] sm:$0xff]
    %v103 = vld [vmem:[%s4 + $0x18] sm:$0xff]
    %vm104 = vcmask 261120
    %v106 = vsel %vm104, %v90, 0
    %v109 = vsel %vm104, %v91, 0
    %111 = vmatprep.subr.mxu0 0.0
    %112 = vmatpush1.msra.mxu0 %v100
    %113 = vmatprep.subr.mxu0 0.0
    %114 = vmatpush1.msra.mxu0 %v101
    %115 = vmatprep.subr.mxu0 0.0
    %116 = vmatpush1.msra.mxu0 %v102
    %117 = vmatprep.subr.mxu0 0.0
    %118 = vmatpush1.msra.mxu0 %v103
    %119 = vmatprep.subr.mxu0 0.0
    %120 = vmatpush1.msra.mxu0 0.0
    %121 = vmatprep.subr.mxu0 0.0
    %122 = vmatpush1.msra.mxu0 0.0
    %123 = vmatprep.subr.mxu0 0.0
    %124 = vmatpush1.msra.mxu0 0.0
    %125 = vmatprep.subr.mxu0 0.0
    %126 = vmatpush1.msra.mxu0 0.0
    %127 = vmatprep.subr.mxu0 0.0
    %128 = vmatpush1.msra.mxu0 0.0
    %129 = vmatprep.subr.mxu0 0.0
    %130 = vmatpush1.msra.mxu0 0.0
    %131 = vmatprep.subr.mxu0 0.0
    %132 = vmatpush1.msra.mxu0 0.0
    %133 = vmatprep.subr.mxu0 0.0
    %134 = vmatpush1.msra.mxu0 0.0
    %135 = vmatprep.subr.mxu0 0.0
    %136 = vmatpush1.msra.mxu0 0.0
    %137 = vmatprep.subr.mxu0 0.0
    %138 = vmatpush1.msra.mxu0 0.0
    %139 = vmatprep.subr.mxu0 0.0
    %140 = vmatpush1.msra.mxu0 0.0
    %141 = vmatprep.subr.mxu0 0.0
    %142 = vmatpush1.msra.mxu0 0.0
    %143 = vmatprep.subr.mxu0 0.0
    %144 = vmatpush1.msra.mxu0 0.0
    %145 = vmatprep.subr.mxu0 0.0
    %146 = vmatpush1.msra.mxu0 0.0
    %147 = vmatprep.subr.mxu0 0.0
    %148 = vmatpush1.msra.mxu0 0.0
    %149 = vmatprep.subr.mxu0 0.0
    %150 = vmatpush1.msra.mxu0 0.0
    %151 = vmatprep.subr.mxu0 0.0
    %152 = vmatpush1.msra.mxu0 0.0
    %153 = vmatprep.subr.mxu0 0.0
    %154 = vmatpush1.msra.mxu0 0.0
    %155 = vmatprep.subr.mxu0 0.0
    %156 = vmatpush1.msra.mxu0 0.0
    %157 = vmatprep.subr.mxu0 0.0
    %158 = vmatpush1.msra.mxu0 0.0
    %159 = vmatprep.subr.mxu0 0.0
    %160 = vmatpush1.msra.mxu0 0.0
    %161 = vmatprep.subr.mxu0 0.0
    %162 = vmatpush1.msra.mxu0 0.0
    %163 = vmatprep.subr.mxu0 0.0
    %164 = vmatpush1.msra.mxu0 0.0
    %165 = vmatprep.subr.mxu0 0.0
    %166 = vmatpush1.msra.mxu0 0.0
    %167 = vmatprep.subr.mxu0 0.0
    %168 = vmatpush1.msra.mxu0 0.0
    %169 = vmatprep.subr.mxu0 0.0
    %170 = vmatpush1.msra.mxu0 0.0
    %171 = vmatprep.subr.mxu0 0.0
    %172 = vmatpush1.msra.mxu0 0.0
    %173 = vmatprep.subr.mxu0 0.0
    %174 = vmatpush1.msra.mxu0 0.0
    %175 = vmatprep.mubr.f32.mxu0 0.0
    %176 = vmatmul.mubr.f32.gmra.mrb[0].mxu0 %v106
    %v177 = vpop.f32.mrb[0].mxu0
    %v178 = vadd.f32 0.0, %v177
    %v179 = vpop.f32.mrb[0].mxu0
    %180 = vmatprep.mubr.f32.mxu0 0.0
    %181 = vmatmul.mubr.f32.gmra.mrb[0].mxu0 %v109
    %v182 = vpop.f32.mrb[0].mxu0
    %v183 = vadd.f32 0.0, %v182
    %v184 = vpop.f32.mrb[0].mxu0
    %185 = vdwg.mxu0
    %s186 = scalar_lea.vmem %s4, 32
    %v187 = vld [vmem:[%s186] sm:$0xff]
    %v188 = vld [vmem:[%s186 + $0x8] sm:$0xff]
    %v189 = vld [vmem:[%s186 + $0x10] sm:$0xff]
    %v190 = vld [vmem:[%s186 + $0x18] sm:$0xff]
    %v192 = vsel %vm104, %v88, 0
    %v195 = vsel %vm104, %v89, 0
    %197 = vmatprep.subr.mxu0 0.0
    %198 = vmatpush1.msra.mxu0 %v187
    %199 = vmatprep.subr.mxu0 0.0
    %200 = vmatpush1.msra.mxu0 %v188
    %201 = vmatprep.subr.mxu0 0.0
    %202 = vmatpush1.msra.mxu0 %v189
    %203 = vmatprep.subr.mxu0 0.0
    %204 = vmatpush1.msra.mxu0 %v190
    %205 = vmatprep.subr.mxu0 0.0
    %206 = vmatpush1.msra.mxu0 0.0
    %207 = vmatprep.subr.mxu0 0.0
    %208 = vmatpush1.msra.mxu0 0.0
    %209 = vmatprep.subr.mxu0 0.0
    %210 = vmatpush1.msra.mxu0 0.0
    %211 = vmatprep.subr.mxu0 0.0
    %212 = vmatpush1.msra.mxu0 0.0
    %213 = vmatprep.subr.mxu0 0.0
    %214 = vmatpush1.msra.mxu0 0.0
    %215 = vmatprep.subr.mxu0 0.0
    %216 = vmatpush1.msra.mxu0 0.0
    %217 = vmatprep.subr.mxu0 0.0
    %218 = vmatpush1.msra.mxu0 0.0
    %219 = vmatprep.subr.mxu0 0.0
    %220 = vmatpush1.msra.mxu0 0.0
    %221 = vmatprep.subr.mxu0 0.0
    %222 = vmatpush1.msra.mxu0 0.0
    %223 = vmatprep.subr.mxu0 0.0
    %224 = vmatpush1.msra.mxu0 0.0
    %225 = vmatprep.subr.mxu0 0.0
    %226 = vmatpush1.msra.mxu0 0.0
    %227 = vmatprep.subr.mxu0 0.0
    %228 = vmatpush1.msra.mxu0 0.0
    %229 = vmatprep.subr.mxu0 0.0
    %230 = vmatpush1.msra.mxu0 0.0
    %231 = vmatprep.subr.mxu0 0.0
    %232 = vmatpush1.msra.mxu0 0.0
    %233 = vmatprep.subr.mxu0 0.0
    %234 = vmatpush1.msra.mxu0 0.0
    %235 = vmatprep.subr.mxu0 0.0
    %236 = vmatpush1.msra.mxu0 0.0
    %237 = vmatprep.subr.mxu0 0.0
    %238 = vmatpush1.msra.mxu0 0.0
    %239 = vmatprep.subr.mxu0 0.0
    %240 = vmatpush1.msra.mxu0 0.0
    %241 = vmatprep.subr.mxu0 0.0
    %242 = vmatpush1.msra.mxu0 0.0
    %243 = vmatprep.subr.mxu0 0.0
    %244 = vmatpush1.msra.mxu0 0.0
    %245 = vmatprep.subr.mxu0 0.0
    %246 = vmatpush1.msra.mxu0 0.0
    %247 = vmatprep.subr.mxu0 0.0
    %248 = vmatpush1.msra.mxu0 0.0
    %249 = vmatprep.subr.mxu0 0.0
    %250 = vmatpush1.msra.mxu0 0.0
    %251 = vmatprep.subr.mxu0 0.0
    %252 = vmatpush1.msra.mxu0 0.0
    %253 = vmatprep.subr.mxu0 0.0
    %254 = vmatpush1.msra.mxu0 0.0
    %255 = vmatprep.subr.mxu0 0.0
    %256 = vmatpush1.msra.mxu0 0.0
    %257 = vmatprep.subr.mxu0 0.0
    %258 = vmatpush1.msra.mxu0 0.0
    %259 = vmatprep.subr.mxu0 0.0
    %260 = vmatpush1.msra.mxu0 0.0
    %261 = vmatprep.mubr.f32.mxu0 0.0
    %262 = vmatmul.mubr.f32.gmra.mrb[0].mxu0 %v192
    %v263 = vpop.f32.mrb[0].mxu0
    %v264 = vadd.f32 0.0, %v263
    %v265 = vpop.f32.mrb[0].mxu0
    %266 = vmatprep.mubr.f32.mxu0 0.0
    %267 = vmatmul.mubr.f32.gmra.mrb[0].mxu0 %v195
    %v268 = vpop.f32.mrb[0].mxu0
    %v269 = vadd.f32 0.0, %v268
    %v270 = vpop.f32.mrb[0].mxu0
    %271 = vdwg.mxu0
    %s272 = scalar_lea.vmem %s4, 64
    %v273 = vld [vmem:[%s272] sm:$0xff]
    %v274 = vld [vmem:[%s272 + $0x8] sm:$0xff]
    %v275 = vld [vmem:[%s272 + $0x10] sm:$0xff]
    %v276 = vld [vmem:[%s272 + $0x18] sm:$0xff]
    %v278 = vsel %vm104, %v92, 0
    %v281 = vsel %vm104, %v93, 0
    %283 = vmatprep.subr.mxu0 0.0
    %284 = vmatpush1.msra.mxu0 %v273
    %285 = vmatprep.subr.mxu0 0.0
    %286 = vmatpush1.msra.mxu0 %v274
    %287 = vmatprep.subr.mxu0 0.0
    %288 = vmatpush1.msra.mxu0 %v275
    %289 = vmatprep.subr.mxu0 0.0
    %290 = vmatpush1.msra.mxu0 %v276
    %291 = vmatprep.subr.mxu0 0.0
    %292 = vmatpush1.msra.mxu0 0.0
    %293 = vmatprep.subr.mxu0 0.0
    %294 = vmatpush1.msra.mxu0 0.0
    %295 = vmatprep.subr.mxu0 0.0
    %296 = vmatpush1.msra.mxu0 0.0
    %297 = vmatprep.subr.mxu0 0.0
    %298 = vmatpush1.msra.mxu0 0.0
    %299 = vmatprep.subr.mxu0 0.0
    %300 = vmatpush1.msra.mxu0 0.0
    %301 = vmatprep.subr.mxu0 0.0
    %302 = vmatpush1.msra.mxu0 0.0
    %303 = vmatprep.subr.mxu0 0.0
    %304 = vmatpush1.msra.mxu0 0.0
    %305 = vmatprep.subr.mxu0 0.0
    %306 = vmatpush1.msra.mxu0 0.0
    %307 = vmatprep.subr.mxu0 0.0
    %308 = vmatpush1.msra.mxu0 0.0
    %309 = vmatprep.subr.mxu0 0.0
    %310 = vmatpush1.msra.mxu0 0.0
    %311 = vmatprep.subr.mxu0 0.0
    %312 = vmatpush1.msra.mxu0 0.0
    %313 = vmatprep.subr.mxu0 0.0
    %314 = vmatpush1.msra.mxu0 0.0
    %315 = vmatprep.subr.mxu0 0.0
    %316 = vmatpush1.msra.mxu0 0.0
    %317 = vmatprep.subr.mxu0 0.0
    %318 = vmatpush1.msra.mxu0 0.0
    %319 = vmatprep.subr.mxu0 0.0
    %320 = vmatpush1.msra.mxu0 0.0
    %321 = vmatprep.subr.mxu0 0.0
    %322 = vmatpush1.msra.mxu0 0.0
    %323 = vmatprep.subr.mxu0 0.0
    %324 = vmatpush1.msra.mxu0 0.0
    %325 = vmatprep.subr.mxu0 0.0
    %326 = vmatpush1.msra.mxu0 0.0
    %327 = vmatprep.subr.mxu0 0.0
    %328 = vmatpush1.msra.mxu0 0.0
    %329 = vmatprep.subr.mxu0 0.0
    %330 = vmatpush1.msra.mxu0 0.0
    %331 = vmatprep.subr.mxu0 0.0
    %332 = vmatpush1.msra.mxu0 0.0
    %333 = vmatprep.subr.mxu0 0.0
    %334 = vmatpush1.msra.mxu0 0.0
    %335 = vmatprep.subr.mxu0 0.0
    %336 = vmatpush1.msra.mxu0 0.0
    %337 = vmatprep.subr.mxu0 0.0
    %338 = vmatpush1.msra.mxu0 0.0
    %339 = vmatprep.subr.mxu0 0.0
    %340 = vmatpush1.msra.mxu0 0.0
    %341 = vmatprep.subr.mxu0 0.0
    %342 = vmatpush1.msra.mxu0 0.0
    %343 = vmatprep.subr.mxu0 0.0
    %344 = vmatpush1.msra.mxu0 0.0
    %345 = vmatprep.subr.mxu0 0.0
    %346 = vmatpush1.msra.mxu0 0.0
    %347 = vmatprep.mubr.f32.mxu0 0.0
    %348 = vmatmul.mubr.f32.gmra.mrb[0].mxu0 %v278
    %v349 = vpop.f32.mrb[0].mxu0
    %v350 = vadd.f32 0.0, %v349
    %v351 = vpop.f32.mrb[0].mxu0
    %352 = vmatprep.mubr.f32.mxu0 0.0
    %353 = vmatmul.mubr.f32.gmra.mrb[0].mxu0 %v281
    %v354 = vpop.f32.mrb[0].mxu0
    %v355 = vadd.f32 0.0, %v354
    %v356 = vpop.f32.mrb[0].mxu0
    %357 = vdwg.mxu0
    %v358 = vld [vmem:[#allocation8] sm:$0xff]
    %v359 = vld [vmem:[#allocation8 + $0x8] sm:$0xff]
    %vm360 = vcmp.gt.f32.partialorder %v358, 0.5
    %vm361 = vcmp.gt.f32.partialorder %v359, 0.5
    %v362 = vld [vmem:[%s8 + $0x6] sm:$0x1]
    %v363 = vlaneseq
    %v364 = vshrl.u32 %v363, 7
    %v365 = vsub.s32 0, %v364
    %v366 = vrot.slane %v362, %v365
    %v367 = vmul.f32 %v178, %v366
    %v368 = vmul.f32 %v183, %v366
    %v370 = vsel %vm104, %v367, 0
    %v373 = vsel %vm104, %v368, 0
    %v376 = vsel %vm104, %v264, 0
    %v379 = vsel %vm104, %v269, 0
    %381 = vmatprep.subr.mxu0 0.0
    %382 = vmatpush1.xpose.msra.mxu0 %v376
    %383 = vmatprep.subr.mxu0 0.0
    %384 = vmatpush1.xpose.msra.mxu0 %v379
    %385 = vmatprep.subr.mxu0 0.0
    %386 = vmatpush1.xpose.msra.mxu0 0.0
    %387 = vmatprep.subr.mxu0 0.0
    %388 = vmatpush1.xpose.msra.mxu0 0.0
    %389 = vmatprep.subr.mxu0 0.0
    %390 = vmatpush1.xpose.msra.mxu0 0.0
    %391 = vmatprep.subr.mxu0 0.0
    %392 = vmatpush1.xpose.msra.mxu0 0.0
    %393 = vmatprep.subr.mxu0 0.0
    %394 = vmatpush1.xpose.msra.mxu0 0.0
    %395 = vmatprep.subr.mxu0 0.0
    %396 = vmatpush1.xpose.msra.mxu0 0.0
    %397 = vmatprep.subr.mxu0 0.0
    %398 = vmatpush1.xpose.msra.mxu0 0.0
    %399 = vmatprep.subr.mxu0 0.0
    %400 = vmatpush1.xpose.msra.mxu0 0.0
    %401 = vmatprep.subr.mxu0 0.0
    %402 = vmatpush1.xpose.msra.mxu0 0.0
    %403 = vmatprep.subr.mxu0 0.0
    %404 = vmatpush1.xpose.msra.mxu0 0.0
    %405 = vmatprep.subr.mxu0 0.0
    %406 = vmatpush1.xpose.msra.mxu0 0.0
    %407 = vmatprep.subr.mxu0 0.0
    %408 = vmatpush1.xpose.msra.mxu0 0.0
    %409 = vmatprep.subr.mxu0 0.0
    %410 = vmatpush1.xpose.msra.mxu0 0.0
    %411 = vmatprep.subr.mxu0 0.0
    %412 = vmatpush1.xpose.msra.mxu0 0.0
    %413 = vmatprep.subr.mxu0 0.0
    %414 = vmatpush1.xpose.msra.mxu0 0.0
    %415 = vmatprep.subr.mxu0 0.0
    %416 = vmatpush1.xpose.msra.mxu0 0.0
    %417 = vmatprep.subr.mxu0 0.0
    %418 = vmatpush1.xpose.msra.mxu0 0.0
    %419 = vmatprep.subr.mxu0 0.0
    %420 = vmatpush1.xpose.msra.mxu0 0.0
    %421 = vmatprep.subr.mxu0 0.0
    %422 = vmatpush1.xpose.msra.mxu0 0.0
    %423 = vmatprep.subr.mxu0 0.0
    %424 = vmatpush1.xpose.msra.mxu0 0.0
    %425 = vmatprep.subr.mxu0 0.0
    %426 = vmatpush1.xpose.msra.mxu0 0.0
    %427 = vmatprep.subr.mxu0 0.0
    %428 = vmatpush1.xpose.msra.mxu0 0.0
    %429 = vmatprep.subr.mxu0 0.0
    %430 = vmatpush1.xpose.msra.mxu0 0.0
    %431 = vmatprep.subr.mxu0 0.0
    %432 = vmatpush1.xpose.msra.mxu0 0.0
    %433 = vmatprep.subr.mxu0 0.0
    %434 = vmatpush1.xpose.msra.mxu0 0.0
    %435 = vmatprep.subr.mxu0 0.0
    %436 = vmatpush1.xpose.msra.mxu0 0.0
    %437 = vmatprep.subr.mxu0 0.0
    %438 = vmatpush1.xpose.msra.mxu0 0.0
    %439 = vmatprep.subr.mxu0 0.0
    %440 = vmatpush1.xpose.msra.mxu0 0.0
    %441 = vmatprep.subr.mxu0 0.0
    %442 = vmatpush1.xpose.msra.mxu0 0.0
    %443 = vmatprep.subr.mxu0 0.0
    %444 = vmatpush1.xpose.msra.mxu0 0.0
    %445 = vmatprep.mubr.f32.mxu0 0.0
    %446 = vmatmul.mubr.f32.gmra.mrb[0].mxu0 %v370
    %v447 = vpop.f32.mrb[0].mxu0
    %v448 = vadd.f32 0.0, %v447
    %v449 = vpop.f32.mrb[0].mxu0
    %450 = vmatprep.mubr.f32.mxu0 0.0
    %451 = vmatmul.mubr.f32.gmra.mrb[0].mxu0 %v373
    %v452 = vpop.f32.mrb[0].mxu0
    %v453 = vadd.f32 0.0, %v452
    %v454 = vpop.f32.mrb[0].mxu0
    %455 = vdwg.mxu0
    %v456 = vsel %vm360, %v448, -1e+20
    %v457 = vsel %vm361, %v453, -1e+20
    %v458 = vmul.f32 %v456, 0.35355338
    %v459 = vmul.f32 %v457, 0.35355338
    %vm460 = vcmask 130048
    %v461 = vsel %vm460, %v458, -inf
    %462 = vmax.xlane.f32.xlu0 %v461
    %v463 = vpop.xlane.xlu0 %462
    %v464 = vsel %vm460, %v459, -inf
    %465 = vmax.xlane.f32.xlu0 %v464
    %v466 = vpop.xlane.xlu0 %465
    %v467 = vsub.f32 %v458, %v463
    %v468 = vsub.f32 %v459, %v466
    %v469 = vmul.f32 %v467, 1.442695
    %v470 = vpow.pop %v469
    %v471 = vmul.f32 %v468, 1.442695
    %v472 = vpow.pop %v471
    %v473 = vsel %vm460, %v470, 0.0
    %474 = vadd.xlane.f32.xlu0 %v473
    %v475 = vpop.xlane.xlu0 %474
    %v476 = vsel %vm460, %v472, 0.0
    %477 = vadd.xlane.f32.xlu0 %v476
    %v478 = vpop.xlane.xlu0 %477
    %v479 = vrcp.pop %v475
    %v480 = vrcp.pop %v478
    %v481 = vmul.f32 %v470, %v479
    %v482 = vmul.f32 %v472, %v480
    %v483 = vmul.f32 %v350, %v366
    %v484 = vmul.f32 %v355, %v366
    %v485 = vld [vmem:[%s8 + $0x7] sm:$0x1]
    %v486 = vlaneseq
    %v487 = vshrl.u32 %v486, 7
    %v488 = vsub.s32 0, %v487
    %v489 = vrot.slane %v485, %v488
    %v490 = vmul.f32 %v178, %v489
    %v491 = vmul.f32 %v183, %v489
    %v493 = vsel %vm104, %v490, 0
    %v496 = vsel %vm104, %v491, 0
    %498 = vmatprep.subr.mxu0 0.0
    %499 = vmatpush1.xpose.msra.mxu0 %v376
    %500 = vmatprep.subr.mxu0 0.0
    %501 = vmatpush1.xpose.msra.mxu0 %v379
    %502 = vmatprep.subr.mxu0 0.0
    %503 = vmatpush1.xpose.msra.mxu0 0.0
    %504 = vmatprep.subr.mxu0 0.0
    %505 = vmatpush1.xpose.msra.mxu0 0.0
    %506 = vmatprep.subr.mxu0 0.0
    %507 = vmatpush1.xpose.msra.mxu0 0.0
    %508 = vmatprep.subr.mxu0 0.0
    %509 = vmatpush1.xpose.msra.mxu0 0.0
    %510 = vmatprep.subr.mxu0 0.0
    %511 = vmatpush1.xpose.msra.mxu0 0.0
    %512 = vmatprep.subr.mxu0 0.0
    %513 = vmatpush1.xpose.msra.mxu0 0.0
    %514 = vmatprep.subr.mxu0 0.0
    %515 = vmatpush1.xpose.msra.mxu0 0.0
    %516 = vmatprep.subr.mxu0 0.0
    %517 = vmatpush1.xpose.msra.mxu0 0.0
    %518 = vmatprep.subr.mxu0 0.0
    %519 = vmatpush1.xpose.msra.mxu0 0.0
    %520 = vmatprep.subr.mxu0 0.0
    %521 = vmatpush1.xpose.msra.mxu0 0.0
    %522 = vmatprep.subr.mxu0 0.0
    %523 = vmatpush1.xpose.msra.mxu0 0.0
    %524 = vmatprep.subr.mxu0 0.0
    %525 = vmatpush1.xpose.msra.mxu0 0.0
    %526 = vmatprep.subr.mxu0 0.0
    %527 = vmatpush1.xpose.msra.mxu0 0.0
    %528 = vmatprep.subr.mxu0 0.0
    %529 = vmatpush1.xpose.msra.mxu0 0.0
    %530 = vmatprep.subr.mxu0 0.0
    %531 = vmatpush1.xpose.msra.mxu0 0.0
    %532 = vmatprep.subr.mxu0 0.0
    %533 = vmatpush1.xpose.msra.mxu0 0.0
    %534 = vmatprep.subr.mxu0 0.0
    %535 = vmatpush1.xpose.msra.mxu0 0.0
    %536 = vmatprep.subr.mxu0 0.0
    %537 = vmatpush1.xpose.msra.mxu0 0.0
    %538 = vmatprep.subr.mxu0 0.0
    %539 = vmatpush1.xpose.msra.mxu0 0.0
    %540 = vmatprep.subr.mxu0 0.0
    %541 = vmatpush1.xpose.msra.mxu0 0.0
    %542 = vmatprep.subr.mxu0 0.0
    %543 = vmatpush1.xpose.msra.mxu0 0.0
    %544 = vmatprep.subr.mxu0 0.0
    %545 = vmatpush1.xpose.msra.mxu0 0.0
    %546 = vmatprep.subr.mxu0 0.0
    %547 = vmatpush1.xpose.msra.mxu0 0.0
    %548 = vmatprep.subr.mxu0 0.0
    %549 = vmatpush1.xpose.msra.mxu0 0.0
    %550 = vmatprep.subr.mxu0 0.0
    %551 = vmatpush1.xpose.msra.mxu0 0.0
    %552 = vmatprep.subr.mxu0 0.0
    %553 = vmatpush1.xpose.msra.mxu0 0.0
    %554 = vmatprep.subr.mxu0 0.0
    %555 = vmatpush1.xpose.msra.mxu0 0.0
    %556 = vmatprep.subr.mxu0 0.0
    %557 = vmatpush1.xpose.msra.mxu0 0.0
    %558 = vmatprep.subr.mxu0 0.0
    %559 = vmatpush1.xpose.msra.mxu0 0.0
    %560 = vmatprep.subr.mxu0 0.0
    %561 = vmatpush1.xpose.msra.mxu0 0.0
    %562 = vmatprep.mubr.f32.mxu0 0.0
    %563 = vmatmul.mubr.f32.gmra.mrb[0].mxu0 %v493
    %v564 = vpop.f32.mrb[0].mxu0
    %v565 = vadd.f32 0.0, %v564
    %v566 = vpop.f32.mrb[0].mxu0
    %567 = vmatprep.mubr.f32.mxu0 0.0
    %568 = vmatmul.mubr.f32.gmra.mrb[0].mxu0 %v496
    %v569 = vpop.f32.mrb[0].mxu0
    %v570 = vadd.f32 0.0, %v569
    %v571 = vpop.f32.mrb[0].mxu0
    %572 = vdwg.mxu0
    %v573 = vsel %vm360, %v565, -1e+20
    %v574 = vsel %vm361, %v570, -1e+20
    %v575 = vmul.f32 %v573, 0.35355338
    %v576 = vmul.f32 %v574, 0.35355338
    %v577 = vsel %vm460, %v575, -inf
    %578 = vmax.xlane.f32.xlu0 %v577
    %v579 = vpop.xlane.xlu0 %578
    %v580 = vsel %vm460, %v576, -inf
    %581 = vmax.xlane.f32.xlu0 %v580
    %v582 = vpop.xlane.xlu0 %581
    %v583 = vsub.f32 %v575, %v579
    %v584 = vsub.f32 %v576, %v582
    %v585 = vmul.f32 %v583, 1.442695
    %v586 = vpow.pop %v585
    %v587 = vmul.f32 %v584, 1.442695
    %v588 = vpow.pop %v587
    %v589 = vsel %vm460, %v586, 0.0
    %590 = vadd.xlane.f32.xlu0 %v589
    %v591 = vpop.xlane.xlu0 %590
    %v592 = vsel %vm460, %v588, 0.0
    %593 = vadd.xlane.f32.xlu0 %v592
    %v594 = vpop.xlane.xlu0 %593
    %v595 = vrcp.pop %v591
    %v596 = vrcp.pop %v594
    %v597 = vmul.f32 %v586, %v595
    %v598 = vmul.f32 %v588, %v596
    %v599 = vmul.f32 %v350, %v489
    %v600 = vmul.f32 %v355, %v489
    %v602 = vsel %vm460, %v597, 0
    %v605 = vsel %vm460, %v598, 0
    %607 = vmatprep.subr.mxu0 0.0
    %608 = vmatpush1.msra.mxu0 %v599
    %609 = vmatprep.subr.mxu0 0.0
    %610 = vmatpush1.msra.mxu0 %v600
    %611 = vmatprep.subr.mxu0 0.0
    %612 = vmatpush1.msra.mxu0 0.0
    %613 = vmatprep.subr.mxu0 0.0
    %614 = vmatpush1.msra.mxu0 0.0
    %615 = vmatprep.subr.mxu0 0.0
    %616 = vmatpush1.msra.mxu0 0.0
    %617 = vmatprep.subr.mxu0 0.0
    %618 = vmatpush1.msra.mxu0 0.0
    %619 = vmatprep.subr.mxu0 0.0
    %620 = vmatpush1.msra.mxu0 0.0
    %621 = vmatprep.subr.mxu0 0.0
    %622 = vmatpush1.msra.mxu0 0.0
    %623 = vmatprep.subr.mxu0 0.0
    %624 = vmatpush1.msra.mxu0 0.0
    %625 = vmatprep.subr.mxu0 0.0
    %626 = vmatpush1.msra.mxu0 0.0
    %627 = vmatprep.subr.mxu0 0.0
    %628 = vmatpush1.msra.mxu0 0.0
    %629 = vmatprep.subr.mxu0 0.0
    %630 = vmatpush1.msra.mxu0 0.0
    %631 = vmatprep.subr.mxu0 0.0
    %632 = vmatpush1.msra.mxu0 0.0
    %633 = vmatprep.subr.mxu0 0.0
    %634 = vmatpush1.msra.mxu0 0.0
    %635 = vmatprep.subr.mxu0 0.0
    %636 = vmatpush1.msra.mxu0 0.0
    %637 = vmatprep.subr.mxu0 0.0
    %638 = vmatpush1.msra.mxu0 0.0
    %639 = vmatprep.subr.mxu0 0.0
    %640 = vmatpush1.msra.mxu0 0.0
    %641 = vmatprep.subr.mxu0 0.0
    %642 = vmatpush1.msra.mxu0 0.0
    %643 = vmatprep.subr.mxu0 0.0
    %644 = vmatpush1.msra.mxu0 0.0
    %645 = vmatprep.subr.mxu0 0.0
    %646 = vmatpush1.msra.mxu0 0.0
    %647 = vmatprep.subr.mxu0 0.0
    %648 = vmatpush1.msra.mxu0 0.0
    %649 = vmatprep.subr.mxu0 0.0
    %650 = vmatpush1.msra.mxu0 0.0
    %651 = vmatprep.subr.mxu0 0.0
    %652 = vmatpush1.msra.mxu0 0.0
    %653 = vmatprep.subr.mxu0 0.0
    %654 = vmatpush1.msra.mxu0 0.0
    %655 = vmatprep.subr.mxu0 0.0
    %656 = vmatpush1.msra.mxu0 0.0
    %657 = vmatprep.subr.mxu0 0.0
    %658 = vmatpush1.msra.mxu0 0.0
    %659 = vmatprep.subr.mxu0 0.0
    %660 = vmatpush1.msra.mxu0 0.0
    %661 = vmatprep.subr.mxu0 0.0
    %662 = vmatpush1.msra.mxu0 0.0
    %663 = vmatprep.subr.mxu0 0.0
    %664 = vmatpush1.msra.mxu0 0.0
    %665 = vmatprep.subr.mxu0 0.0
    %666 = vmatpush1.msra.mxu0 0.0
    %667 = vmatprep.subr.mxu0 0.0
    %668 = vmatpush1.msra.mxu0 0.0
    %669 = vmatprep.subr.mxu0 0.0
    %670 = vmatpush1.msra.mxu0 0.0
    %671 = vmatprep.mubr.f32.mxu0 0.0
    %672 = vmatmul.mubr.f32.gmra.mrb[0].mxu0 %v602
    %v673 = vpop.f32.mrb[0].mxu0
    %v674 = vadd.f32 0.0, %v673
    %v675 = vpop.f32.mrb[0].mxu0
    %676 = vmatprep.mubr.f32.mxu0 0.0
    %677 = vmatmul.mubr.f32.gmra.mrb[0].mxu0 %v605
    %v678 = vpop.f32.mrb[0].mxu0
    %v679 = vadd.f32 0.0, %v678
    %v680 = vpop.f32.mrb[0].mxu0
    %681 = vdwg.mxu0
    %v683 = vsel %vm460, %v481, 0
    %v686 = vsel %vm460, %v482, 0
    %688 = vmatprep.subr.mxu0 0.0
    %689 = vmatpush1.msra.mxu0 %v483
    %690 = vmatprep.subr.mxu0 0.0
    %691 = vmatpush1.msra.mxu0 %v484
    %692 = vmatprep.subr.mxu0 0.0
    %693 = vmatpush1.msra.mxu0 0.0
    %694 = vmatprep.subr.mxu0 0.0
    %695 = vmatpush1.msra.mxu0 0.0
    %696 = vmatprep.subr.mxu0 0.0
    %697 = vmatpush1.msra.mxu0 0.0
    %698 = vmatprep.subr.mxu0 0.0
    %699 = vmatpush1.msra.mxu0 0.0
    %700 = vmatprep.subr.mxu0 0.0
    %701 = vmatpush1.msra.mxu0 0.0
    %702 = vmatprep.subr.mxu0 0.0
    %703 = vmatpush1.msra.mxu0 0.0
    %704 = vmatprep.subr.mxu0 0.0
    %705 = vmatpush1.msra.mxu0 0.0
    %706 = vmatprep.subr.mxu0 0.0
    %707 = vmatpush1.msra.mxu0 0.0
    %708 = vmatprep.subr.mxu0 0.0
    %709 = vmatpush1.msra.mxu0 0.0
    %710 = vmatprep.subr.mxu0 0.0
    %711 = vmatpush1.msra.mxu0 0.0
    %712 = vmatprep.subr.mxu0 0.0
    %713 = vmatpush1.msra.mxu0 0.0
    %714 = vmatprep.subr.mxu0 0.0
    %715 = vmatpush1.msra.mxu0 0.0
    %716 = vmatprep.subr.mxu0 0.0
    %717 = vmatpush1.msra.mxu0 0.0
    %718 = vmatprep.subr.mxu0 0.0
    %719 = vmatpush1.msra.mxu0 0.0
    %720 = vmatprep.subr.mxu0 0.0
    %721 = vmatpush1.msra.mxu0 0.0
    %722 = vmatprep.subr.mxu0 0.0
    %723 = vmatpush1.msra.mxu0 0.0
    %724 = vmatprep.subr.mxu0 0.0
    %725 = vmatpush1.msra.mxu0 0.0
    %726 = vmatprep.subr.mxu0 0.0
    %727 = vmatpush1.msra.mxu0 0.0
    %728 = vmatprep.subr.mxu0 0.0
    %729 = vmatpush1.msra.mxu0 0.0
    %730 = vmatprep.subr.mxu0 0.0
    %731 = vmatpush1.msra.mxu0 0.0
    %732 = vmatprep.subr.mxu0 0.0
    %733 = vmatpush1.msra.mxu0 0.0
    %734 = vmatprep.subr.mxu0 0.0
    %735 = vmatpush1.msra.mxu0 0.0
    %736 = vmatprep.subr.mxu0 0.0
    %737 = vmatpush1.msra.mxu0 0.0
    %738 = vmatprep.subr.mxu0 0.0
    %739 = vmatpush1.msra.mxu0 0.0
    %740 = vmatprep.subr.mxu0 0.0
    %741 = vmatpush1.msra.mxu0 0.0
    %742 = vmatprep.subr.mxu0 0.0
    %743 = vmatpush1.msra.mxu0 0.0
    %744 = vmatprep.subr.mxu0 0.0
    %745 = vmatpush1.msra.mxu0 0.0
    %746 = vmatprep.subr.mxu0 0.0
    %747 = vmatpush1.msra.mxu0 0.0
    %748 = vmatprep.subr.mxu0 0.0
    %749 = vmatpush1.msra.mxu0 0.0
    %750 = vmatprep.subr.mxu0 0.0
    %751 = vmatpush1.msra.mxu0 0.0
    %752 = vmatprep.mubr.f32.mxu0 0.0
    %753 = vmatmul.mubr.f32.gmra.mrb[0].mxu0 %v683
    %v754 = vpop.f32.mrb[0].mxu0
    %v755 = vadd.f32 %v674, %v754
    %v756 = vpop.f32.mrb[0].mxu0
    %757 = vmatprep.mubr.f32.mxu0 0.0
    %758 = vmatmul.mubr.f32.gmra.mrb[0].mxu0 %v686
    %v759 = vpop.f32.mrb[0].mxu0
    %v760 = vadd.f32 %v679, %v759
    %v761 = vpop.f32.mrb[0].mxu0
    %762 = vdwg.mxu0
    %v763 = vld [vmem:[%s8 + $0x8] sm:$0x1]
    %v764 = vlaneseq
    %v765 = vshrl.u32 %v764, 7
    %v766 = vsub.s32 0, %v765
    %v767 = vrot.slane %v763, %v766
    %v768 = vmul.f32 %v178, %v767
    %v769 = vmul.f32 %v183, %v767
    %v771 = vsel %vm104, %v768, 0
    %v774 = vsel %vm104, %v769, 0
    %776 = vmatprep.subr.mxu0 0.0
    %777 = vmatpush1.xpose.msra.mxu0 %v376
    %778 = vmatprep.subr.mxu0 0.0
    %779 = vmatpush1.xpose.msra.mxu0 %v379
    %780 = vmatprep.subr.mxu0 0.0
    %781 = vmatpush1.xpose.msra.mxu0 0.0
    %782 = vmatprep.subr.mxu0 0.0
    %783 = vmatpush1.xpose.msra.mxu0 0.0
    %784 = vmatprep.subr.mxu0 0.0
    %785 = vmatpush1.xpose.msra.mxu0 0.0
    %786 = vmatprep.subr.mxu0 0.0
    %787 = vmatpush1.xpose.msra.mxu0 0.0
    %788 = vmatprep.subr.mxu0 0.0
    %789 = vmatpush1.xpose.msra.mxu0 0.0
    %790 = vmatprep.subr.mxu0 0.0
    %791 = vmatpush1.xpose.msra.mxu0 0.0
    %792 = vmatprep.subr.mxu0 0.0
    %793 = vmatpush1.xpose.msra.mxu0 0.0
    %794 = vmatprep.subr.mxu0 0.0
    %795 = vmatpush1.xpose.msra.mxu0 0.0
    %796 = vmatprep.subr.mxu0 0.0
    %797 = vmatpush1.xpose.msra.mxu0 0.0
    %798 = vmatprep.subr.mxu0 0.0
    %799 = vmatpush1.xpose.msra.mxu0 0.0
    %800 = vmatprep.subr.mxu0 0.0
    %801 = vmatpush1.xpose.msra.mxu0 0.0
    %802 = vmatprep.subr.mxu0 0.0
    %803 = vmatpush1.xpose.msra.mxu0 0.0
    %804 = vmatprep.subr.mxu0 0.0
    %805 = vmatpush1.xpose.msra.mxu0 0.0
    %806 = vmatprep.subr.mxu0 0.0
    %807 = vmatpush1.xpose.msra.mxu0 0.0
    %808 = vmatprep.subr.mxu0 0.0
    %809 = vmatpush1.xpose.msra.mxu0 0.0
    %810 = vmatprep.subr.mxu0 0.0
    %811 = vmatpush1.xpose.msra.mxu0 0.0
    %812 = vmatprep.subr.mxu0 0.0
    %813 = vmatpush1.xpose.msra.mxu0 0.0
    %814 = vmatprep.subr.mxu0 0.0
    %815 = vmatpush1.xpose.msra.mxu0 0.0
    %816 = vmatprep.subr.mxu0 0.0
    %817 = vmatpush1.xpose.msra.mxu0 0.0
    %818 = vmatprep.subr.mxu0 0.0
    %819 = vmatpush1.xpose.msra.mxu0 0.0
    %820 = vmatprep.subr.mxu0 0.0
    %821 = vmatpush1.xpose.msra.mxu0 0.0
    %822 = vmatprep.subr.mxu0 0.0
    %823 = vmatpush1.xpose.msra.mxu0 0.0
    %824 = vmatprep.subr.mxu0 0.0
    %825 = vmatpush1.xpose.msra.mxu0 0.0
    %826 = vmatprep.subr.mxu0 0.0
    %827 = vmatpush1.xpose.msra.mxu0 0.0
    %828 = vmatprep.subr.mxu0 0.0
    %829 = vmatpush1.xpose.msra.mxu0 0.0
    %830 = vmatprep.subr.mxu0 0.0
    %831 = vmatpush1.xpose.msra.mxu0 0.0
    %832 = vmatprep.subr.mxu0 0.0
    %833 = vmatpush1.xpose.msra.mxu0 0.0
    %834 = vmatprep.subr.mxu0 0.0
    %835 = vmatpush1.xpose.msra.mxu0 0.0
    %836 = vmatprep.subr.mxu0 0.0
    %837 = vmatpush1.xpose.msra.mxu0 0.0
    %838 = vmatprep.subr.mxu0 0.0
    %839 = vmatpush1.xpose.msra.mxu0 0.0
    %840 = vmatprep.mubr.f32.mxu0 0.0
    %841 = vmatmul.mubr.f32.gmra.mrb[0].mxu0 %v771
    %v842 = vpop.f32.mrb[0].mxu0
    %v843 = vadd.f32 0.0, %v842
    %v844 = vpop.f32.mrb[0].mxu0
    %845 = vmatprep.mubr.f32.mxu0 0.0
    %846 = vmatmul.mubr.f32.gmra.mrb[0].mxu0 %v774
    %v847 = vpop.f32.mrb[0].mxu0
    %v848 = vadd.f32 0.0, %v847
    %v849 = vpop.f32.mrb[0].mxu0
    %850 = vdwg.mxu0
    %v851 = vsel %vm360, %v843, -1e+20
    %v852 = vsel %vm361, %v848, -1e+20
    %v853 = vmul.f32 %v851, 0.35355338
    %v854 = vmul.f32 %v852, 0.35355338
    %v855 = vsel %vm460, %v853, -inf
    %856 = vmax.xlane.f32.xlu0 %v855
    %v857 = vpop.xlane.xlu0 %856
    %v858 = vsel %vm460, %v854, -inf
    %859 = vmax.xlane.f32.xlu0 %v858
    %v860 = vpop.xlane.xlu0 %859
    %v861 = vsub.f32 %v853, %v857
    %v862 = vsub.f32 %v854, %v860
    %v863 = vmul.f32 %v861, 1.442695
    %v864 = vpow.pop %v863
    %v865 = vmul.f32 %v862, 1.442695
    %v866 = vpow.pop %v865
    %v867 = vsel %vm460, %v864, 0.0
    %868 = vadd.xlane.f32.xlu0 %v867
    %v869 = vpop.xlane.xlu0 %868
    %v870 = vsel %vm460, %v866, 0.0
    %871 = vadd.xlane.f32.xlu0 %v870
    %v872 = vpop.xlane.xlu0 %871
    %v873 = vrcp.pop %v869
    %v874 = vrcp.pop %v872
    %v875 = vmul.f32 %v864, %v873
    %v876 = vmul.f32 %v866, %v874
    %v877 = vmul.f32 %v350, %v767
    %v878 = vmul.f32 %v355, %v767
    %v880 = vsel %vm460, %v875, 0
    %v883 = vsel %vm460, %v876, 0
    %885 = vmatprep.subr.mxu0 0.0
    %886 = vmatpush1.msra.mxu0 %v877
    %887 = vmatprep.subr.mxu0 0.0
    %888 = vmatpush1.msra.mxu0 %v878
    %889 = vmatprep.subr.mxu0 0.0
    %890 = vmatpush1.msra.mxu0 0.0
    %891 = vmatprep.subr.mxu0 0.0
    %892 = vmatpush1.msra.mxu0 0.0
    %893 = vmatprep.subr.mxu0 0.0
    %894 = vmatpush1.msra.mxu0 0.0
    %895 = vmatprep.subr.mxu0 0.0
    %896 = vmatpush1.msra.mxu0 0.0
    %897 = vmatprep.subr.mxu0 0.0
    %898 = vmatpush1.msra.mxu0 0.0
    %899 = vmatprep.subr.mxu0 0.0
    %900 = vmatpush1.msra.mxu0 0.0
    %901 = vmatprep.subr.mxu0 0.0
    %902 = vmatpush1.msra.mxu0 0.0
    %903 = vmatprep.subr.mxu0 0.0
    %904 = vmatpush1.msra.mxu0 0.0
    %905 = vmatprep.subr.mxu0 0.0
    %906 = vmatpush1.msra.mxu0 0.0
    %907 = vmatprep.subr.mxu0 0.0
    %908 = vmatpush1.msra.mxu0 0.0
    %909 = vmatprep.subr.mxu0 0.0
    %910 = vmatpush1.msra.mxu0 0.0
    %911 = vmatprep.subr.mxu0 0.0
    %912 = vmatpush1.msra.mxu0 0.0
    %913 = vmatprep.subr.mxu0 0.0
    %914 = vmatpush1.msra.mxu0 0.0
    %915 = vmatprep.subr.mxu0 0.0
    %916 = vmatpush1.msra.mxu0 0.0
    %917 = vmatprep.subr.mxu0 0.0
    %918 = vmatpush1.msra.mxu0 0.0
    %919 = vmatprep.subr.mxu0 0.0
    %920 = vmatpush1.msra.mxu0 0.0
    %921 = vmatprep.subr.mxu0 0.0
    %922 = vmatpush1.msra.mxu0 0.0
    %923 = vmatprep.subr.mxu0 0.0
    %924 = vmatpush1.msra.mxu0 0.0
    %925 = vmatprep.subr.mxu0 0.0
    %926 = vmatpush1.msra.mxu0 0.0
    %927 = vmatprep.subr.mxu0 0.0
    %928 = vmatpush1.msra.mxu0 0.0
    %929 = vmatprep.subr.mxu0 0.0
    %930 = vmatpush1.msra.mxu0 0.0
    %931 = vmatprep.subr.mxu0 0.0
    %932 = vmatpush1.msra.mxu0 0.0
    %933 = vmatprep.subr.mxu0 0.0
    %934 = vmatpush1.msra.mxu0 0.0
    %935 = vmatprep.subr.mxu0 0.0
    %936 = vmatpush1.msra.mxu0 0.0
    %937 = vmatprep.subr.mxu0 0.0
    %938 = vmatpush1.msra.mxu0 0.0
    %939 = vmatprep.subr.mxu0 0.0
    %940 = vmatpush1.msra.mxu0 0.0
    %941 = vmatprep.subr.mxu0 0.0
    %942 = vmatpush1.msra.mxu0 0.0
    %943 = vmatprep.subr.mxu0 0.0
    %944 = vmatpush1.msra.mxu0 0.0
    %945 = vmatprep.subr.mxu0 0.0
    %946 = vmatpush1.msra.mxu0 0.0
    %947 = vmatprep.subr.mxu0 0.0
    %948 = vmatpush1.msra.mxu0 0.0
    %949 = vmatprep.mubr.f32.mxu0 0.0
    %950 = vmatmul.mubr.f32.gmra.mrb[0].mxu0 %v880
    %v951 = vpop.f32.mrb[0].mxu0
    %v952 = vadd.f32 0.0, %v951
    %v953 = vpop.f32.mrb[0].mxu0
    %954 = vmatprep.mubr.f32.mxu0 0.0
    %955 = vmatmul.mubr.f32.gmra.mrb[0].mxu0 %v883
    %v956 = vpop.f32.mrb[0].mxu0
    %v957 = vadd.f32 0.0, %v956
    %v958 = vpop.f32.mrb[0].mxu0
    %959 = vdwg.mxu0
    %v960 = vadd.f32 %v755, %v952
    %v961 = vadd.f32 %v760, %v957
    %v962 = vld [vmem:[%s8 + $0x9] sm:$0x1]
    %v963 = vlaneseq
    %v964 = vshrl.u32 %v963, 7
    %v965 = vsub.s32 0, %v964
    %v966 = vrot.slane %v962, %v965
    %v967 = vmul.f32 %v178, %v966
    %v968 = vmul.f32 %v183, %v966
    %v970 = vsel %vm104, %v967, 0
    %v973 = vsel %vm104, %v968, 0
    %975 = vmatprep.subr.mxu0 0.0
    %976 = vmatpush1.xpose.msra.mxu0 %v376
    %977 = vmatprep.subr.mxu0 0.0
    %978 = vmatpush1.xpose.msra.mxu0 %v379
    %979 = vmatprep.subr.mxu0 0.0
    %980 = vmatpush1.xpose.msra.mxu0 0.0
    %981 = vmatprep.subr.mxu0 0.0
    %982 = vmatpush1.xpose.msra.mxu0 0.0
    %983 = vmatprep.subr.mxu0 0.0
    %984 = vmatpush1.xpose.msra.mxu0 0.0
    %985 = vmatprep.subr.mxu0 0.0
    %986 = vmatpush1.xpose.msra.mxu0 0.0
    %987 = vmatprep.subr.mxu0 0.0
    %988 = vmatpush1.xpose.msra.mxu0 0.0
    %989 = vmatprep.subr.mxu0 0.0
    %990 = vmatpush1.xpose.msra.mxu0 0.0
    %991 = vmatprep.subr.mxu0 0.0
    %992 = vmatpush1.xpose.msra.mxu0 0.0
    %993 = vmatprep.subr.mxu0 0.0
    %994 = vmatpush1.xpose.msra.mxu0 0.0
    %995 = vmatprep.subr.mxu0 0.0
    %996 = vmatpush1.xpose.msra.mxu0 0.0
    %997 = vmatprep.subr.mxu0 0.0
    %998 = vmatpush1.xpose.msra.mxu0 0.0
    %999 = vmatprep.subr.mxu0 0.0
    %1000 = vmatpush1.xpose.msra.mxu0 0.0
    %1001 = vmatprep.subr.mxu0 0.0
    %1002 = vmatpush1.xpose.msra.mxu0 0.0
    %1003 = vmatprep.subr.mxu0 0.0
    %1004 = vmatpush1.xpose.msra.mxu0 0.0
    %1005 = vmatprep.subr.mxu0 0.0
    %1006 = vmatpush1.xpose.msra.mxu0 0.0
    %1007 = vmatprep.subr.mxu0 0.0
    %1008 = vmatpush1.xpose.msra.mxu0 0.0
    %1009 = vmatprep.subr.mxu0 0.0
    %1010 = vmatpush1.xpose.msra.mxu0 0.0
    %1011 = vmatprep.subr.mxu0 0.0
    %1012 = vmatpush1.xpose.msra.mxu0 0.0
    %1013 = vmatprep.subr.mxu0 0.0
    %1014 = vmatpush1.xpose.msra.mxu0 0.0
    %1015 = vmatprep.subr.mxu0 0.0
    %1016 = vmatpush1.xpose.msra.mxu0 0.0
    %1017 = vmatprep.subr.mxu0 0.0
    %1018 = vmatpush1.xpose.msra.mxu0 0.0
    %1019 = vmatprep.subr.mxu0 0.0
    %1020 = vmatpush1.xpose.msra.mxu0 0.0
    %1021 = vmatprep.subr.mxu0 0.0
    %1022 = vmatpush1.xpose.msra.mxu0 0.0
    %1023 = vmatprep.subr.mxu0 0.0
    %1024 = vmatpush1.xpose.msra.mxu0 0.0
    %1025 = vmatprep.subr.mxu0 0.0
    %1026 = vmatpush1.xpose.msra.mxu0 0.0
    %1027 = vmatprep.subr.mxu0 0.0
    %1028 = vmatpush1.xpose.msra.mxu0 0.0
    %1029 = vmatprep.subr.mxu0 0.0
    %1030 = vmatpush1.xpose.msra.mxu0 0.0
    %1031 = vmatprep.subr.mxu0 0.0
    %1032 = vmatpush1.xpose.msra.mxu0 0.0
    %1033 = vmatprep.subr.mxu0 0.0
    %1034 = vmatpush1.xpose.msra.mxu0 0.0
    %1035 = vmatprep.subr.mxu0 0.0
    %1036 = vmatpush1.xpose.msra.mxu0 0.0
    %1037 = vmatprep.subr.mxu0 0.0
    %1038 = vmatpush1.xpose.msra.mxu0 0.0
    %1039 = vmatprep.mubr.f32.mxu0 0.0
    %1040 = vmatmul.mubr.f32.gmra.mrb[0].mxu0 %v970
    %v1041 = vpop.f32.mrb[0].mxu0
    %v1042 = vadd.f32 0.0, %v1041
    %v1043 = vpop.f32.mrb[0].mxu0
    %1044 = vmatprep.mubr.f32.mxu0 0.0
    %1045 = vmatmul.mubr.f32.gmra.mrb[0].mxu0 %v973
    %v1046 = vpop.f32.mrb[0].mxu0
    %v1047 = vadd.f32 0.0, %v1046
    %v1048 = vpop.f32.mrb[0].mxu0
    %1049 = vdwg.mxu0
    %v1050 = vsel %vm360, %v1042, -1e+20
    %v1051 = vsel %vm361, %v1047, -1e+20
    %v1052 = vmul.f32 %v1050, 0.35355338
    %v1053 = vmul.f32 %v1051, 0.35355338
    %v1054 = vsel %vm460, %v1052, -inf
    %1055 = vmax.xlane.f32.xlu0 %v1054
    %v1056 = vpop.xlane.xlu0 %1055
    %v1057 = vsel %vm460, %v1053, -inf
    %1058 = vmax.xlane.f32.xlu0 %v1057
    %v1059 = vpop.xlane.xlu0 %1058
    %v1060 = vsub.f32 %v1052, %v1056
    %v1061 = vsub.f32 %v1053, %v1059
    %v1062 = vmul.f32 %v1060, 1.442695
    %v1063 = vpow.pop %v1062
    %v1064 = vmul.f32 %v1061, 1.442695
    %v1065 = vpow.pop %v1064
    %v1066 = vsel %vm460, %v1063, 0.0
    %1067 = vadd.xlane.f32.xlu0 %v1066
    %v1068 = vpop.xlane.xlu0 %1067
    %v1069 = vsel %vm460, %v1065, 0.0
    %1070 = vadd.xlane.f32.xlu0 %v1069
    %v1071 = vpop.xlane.xlu0 %1070
    %v1072 = vrcp.pop %v1068
    %v1073 = vrcp.pop %v1071
    %v1074 = vmul.f32 %v1063, %v1072
    %v1075 = vmul.f32 %v1065, %v1073
    %v1076 = vmul.f32 %v350, %v966
    %v1077 = vmul.f32 %v355, %v966
    %v1079 = vsel %vm460, %v1074, 0
    %v1082 = vsel %vm460, %v1075, 0
    %1084 = vmatprep.subr.mxu0 0.0
    %1085 = vmatpush1.msra.mxu0 %v1076
    %1086 = vmatprep.subr.mxu0 0.0
    %1087 = vmatpush1.msra.mxu0 %v1077
    %1088 = vmatprep.subr.mxu0 0.0
    %1089 = vmatpush1.msra.mxu0 0.0
    %1090 = vmatprep.subr.mxu0 0.0
    %1091 = vmatpush1.msra.mxu0 0.0
    %1092 = vmatprep.subr.mxu0 0.0
    %1093 = vmatpush1.msra.mxu0 0.0
    %1094 = vmatprep.subr.mxu0 0.0
    %1095 = vmatpush1.msra.mxu0 0.0
    %1096 = vmatprep.subr.mxu0 0.0
    %1097 = vmatpush1.msra.mxu0 0.0
    %1098 = vmatprep.subr.mxu0 0.0
    %1099 = vmatpush1.msra.mxu0 0.0
    %1100 = vmatprep.subr.mxu0 0.0
    %1101 = vmatpush1.msra.mxu0 0.0
    %1102 = vmatprep.subr.mxu0 0.0
    %1103 = vmatpush1.msra.mxu0 0.0
    %1104 = vmatprep.subr.mxu0 0.0
    %1105 = vmatpush1.msra.mxu0 0.0
    %1106 = vmatprep.subr.mxu0 0.0
    %1107 = vmatpush1.msra.mxu0 0.0
    %1108 = vmatprep.subr.mxu0 0.0
    %1109 = vmatpush1.msra.mxu0 0.0
    %1110 = vmatprep.subr.mxu0 0.0
    %1111 = vmatpush1.msra.mxu0 0.0
    %1112 = vmatprep.subr.mxu0 0.0
    %1113 = vmatpush1.msra.mxu0 0.0
    %1114 = vmatprep.subr.mxu0 0.0
    %1115 = vmatpush1.msra.mxu0 0.0
    %1116 = vmatprep.subr.mxu0 0.0
    %1117 = vmatpush1.msra.mxu0 0.0
    %1118 = vmatprep.subr.mxu0 0.0
    %1119 = vmatpush1.msra.mxu0 0.0
    %1120 = vmatprep.subr.mxu0 0.0
    %1121 = vmatpush1.msra.mxu0 0.0
    %1122 = vmatprep.subr.mxu0 0.0
    %1123 = vmatpush1.msra.mxu0 0.0
    %1124 = vmatprep.subr.mxu0 0.0
    %1125 = vmatpush1.msra.mxu0 0.0
    %1126 = vmatprep.subr.mxu0 0.0
    %1127 = vmatpush1.msra.mxu0 0.0
    %1128 = vmatprep.subr.mxu0 0.0
    %1129 = vmatpush1.msra.mxu0 0.0
    %1130 = vmatprep.subr.mxu0 0.0
    %1131 = vmatpush1.msra.mxu0 0.0
    %1132 = vmatprep.subr.mxu0 0.0
    %1133 = vmatpush1.msra.mxu0 0.0
    %1134 = vmatprep.subr.mxu0 0.0
    %1135 = vmatpush1.msra.mxu0 0.0
    %1136 = vmatprep.subr.mxu0 0.0
    %1137 = vmatpush1.msra.mxu0 0.0
    %1138 = vmatprep.subr.mxu0 0.0
    %1139 = vmatpush1.msra.mxu0 0.0
    %1140 = vmatprep.subr.mxu0 0.0
    %1141 = vmatpush1.msra.mxu0 0.0
    %1142 = vmatprep.subr.mxu0 0.0
    %1143 = vmatpush1.msra.mxu0 0.0
    %1144 = vmatprep.subr.mxu0 0.0
    %1145 = vmatpush1.msra.mxu0 0.0
    %1146 = vmatprep.subr.mxu0 0.0
    %1147 = vmatpush1.msra.mxu0 0.0
    %1148 = vmatprep.mubr.f32.mxu0 0.0
    %1149 = vmatmul.mubr.f32.gmra.mrb[0].mxu0 %v1079
    %v1150 = vpop.f32.mrb[0].mxu0
    %v1151 = vadd.f32 0.0, %v1150
    %v1152 = vpop.f32.mrb[0].mxu0
    %1153 = vmatprep.mubr.f32.mxu0 0.0
    %1154 = vmatmul.mubr.f32.gmra.mrb[0].mxu0 %v1082
    %v1155 = vpop.f32.mrb[0].mxu0
    %v1156 = vadd.f32 0.0, %v1155
    %v1157 = vpop.f32.mrb[0].mxu0
    %1158 = vdwg.mxu0
    %v1159 = vadd.f32 %v960, %v1151
    %v1160 = vadd.f32 %v961, %v1156
    %s1161 = scalar_lea.vmem %s4, 96
    %v1162 = vld [vmem:[%s1161] sm:$0xff]
    %v1163 = vld [vmem:[%s1161 + $0x8] sm:$0xff]
    %v1164 = vld [vmem:[%s1161 + $0x10] sm:$0xff]
    %v1165 = vld [vmem:[%s1161 + $0x18] sm:$0xff]
    %v1166 = vlaneseq
    %v1167 = vshrl.u32 %v1166, 7
    %v1168 = vsub.s32 0, %v1167
    %v1169 = vrot.slane %v94, %v1168
    %v1171 = vsel %vm104, %v1159, 0
    %v1174 = vsel %vm104, %v1160, 0
    %1176 = vmatprep.subr.mxu0 0.0
    %1177 = vmatpush1.msra.mxu0 %v1162
    %1178 = vmatprep.subr.mxu0 0.0
    %1179 = vmatpush1.msra.mxu0 %v1163
    %1180 = vmatprep.subr.mxu0 0.0
    %1181 = vmatpush1.msra.mxu0 %v1164
    %1182 = vmatprep.subr.mxu0 0.0
    %1183 = vmatpush1.msra.mxu0 %v1165
    %1184 = vmatprep.subr.mxu0 0.0
    %1185 = vmatpush1.msra.mxu0 0.0
    %1186 = vmatprep.subr.mxu0 0.0
    %1187 = vmatpush1.msra.mxu0 0.0
    %1188 = vmatprep.subr.mxu0 0.0
    %1189 = vmatpush1.msra.mxu0 0.0
    %1190 = vmatprep.subr.mxu0 0.0
    %1191 = vmatpush1.msra.mxu0 0.0
    %1192 = vmatprep.subr.mxu0 0.0
    %1193 = vmatpush1.msra.mxu0 0.0
    %1194 = vmatprep.subr.mxu0 0.0
    %1195 = vmatpush1.msra.mxu0 0.0
    %1196 = vmatprep.subr.mxu0 0.0
    %1197 = vmatpush1.msra.mxu0 0.0
    %1198 = vmatprep.subr.mxu0 0.0
    %1199 = vmatpush1.msra.mxu0 0.0
    %1200 = vmatprep.subr.mxu0 0.0
    %1201 = vmatpush1.msra.mxu0 0.0
    %1202 = vmatprep.subr.mxu0 0.0
    %1203 = vmatpush1.msra.mxu0 0.0
    %1204 = vmatprep.subr.mxu0 0.0
    %1205 = vmatpush1.msra.mxu0 0.0
    %1206 = vmatprep.subr.mxu0 0.0
    %1207 = vmatpush1.msra.mxu0 0.0
    %1208 = vmatprep.subr.mxu0 0.0
    %1209 = vmatpush1.msra.mxu0 0.0
    %1210 = vmatprep.subr.mxu0 0.0
    %1211 = vmatpush1.msra.mxu0 0.0
    %1212 = vmatprep.subr.mxu0 0.0
    %1213 = vmatpush1.msra.mxu0 0.0
    %1214 = vmatprep.subr.mxu0 0.0
    %1215 = vmatpush1.msra.mxu0 0.0
    %1216 = vmatprep.subr.mxu0 0.0
    %1217 = vmatpush1.msra.mxu0 0.0
    %1218 = vmatprep.subr.mxu0 0.0
    %1219 = vmatpush1.msra.mxu0 0.0
    %1220 = vmatprep.subr.mxu0 0.0
    %1221 = vmatpush1.msra.mxu0 0.0
    %1222 = vmatprep.subr.mxu0 0.0
    %1223 = vmatpush1.msra.mxu0 0.0
    %1224 = vmatprep.subr.mxu0 0.0
    %1225 = vmatpush1.msra.mxu0 0.0
    %1226 = vmatprep.subr.mxu0 0.0
    %1227 = vmatpush1.msra.mxu0 0.0
    %1228 = vmatprep.subr.mxu0 0.0
    %1229 = vmatpush1.msra.mxu0 0.0
    %1230 = vmatprep.subr.mxu0 0.0
    %1231 = vmatpush1.msra.mxu0 0.0
    %1232 = vmatprep.subr.mxu0 0.0
    %1233 = vmatpush1.msra.mxu0 0.0
    %1234 = vmatprep.subr.mxu0 0.0
    %1235 = vmatpush1.msra.mxu0 0.0
    %1236 = vmatprep.subr.mxu0 0.0
    %1237 = vmatpush1.msra.mxu0 0.0
    %1238 = vmatprep.subr.mxu0 0.0
    %1239 = vmatpush1.msra.mxu0 0.0
    %1240 = vmatprep.mubr.f32.mxu0 0.0
    %1241 = vmatmul.mubr.f32.gmra.mrb[0].mxu0 %v1171
    %v1242 = vpop.f32.mrb[0].mxu0
    %v1243 = vadd.f32 %v1169, %v1242
    %v1244 = vpop.f32.mrb[0].mxu0
    %1245 = vmatprep.mubr.f32.mxu0 0.0
    %1246 = vmatmul.mubr.f32.gmra.mrb[0].mxu0 %v1174
    %v1247 = vpop.f32.mrb[0].mxu0
    %v1248 = vadd.f32 %v1169, %v1247
    %v1249 = vpop.f32.mrb[0].mxu0
    %1250 = vdwg.mxu0
    %v1251 = vadd.f32 %v1243, %v92
    %v1252 = vadd.f32 %v1248, %v93
    %v1253 = vsel %vm104, %v1251, 0.0
    %1254 = vadd.xlane.f32.xlu0 %v1253
    %v1255 = vpop.xlane.xlu0 %1254
    %v1256 = vsel %vm104, %v1252, 0.0
    %1257 = vadd.xlane.f32.xlu0 %v1256
    %v1258 = vpop.xlane.xlu0 %1257
    %v1259 = vrcp.pop 32.0
    %v1260 = vmul.f32 %v1255, %v1259
    %v1261 = vmul.f32 %v1258, %v1259
    %v1262 = vsub.f32 %v1251, %v1260
    %v1263 = vsub.f32 %v1252, %v1261
    %v1264 = vmul.f32 %v1262, %v1262
    %v1265 = vmul.f32 %v1263, %v1263
    %v1266 = vsel %vm104, %v1264, 0.0
    %1267 = vadd.xlane.f32.xlu0 %v1266
    %v1268 = vpop.xlane.xlu0 %1267
    %v1269 = vsel %vm104, %v1265, 0.0
    %1270 = vadd.xlane.f32.xlu0 %v1269
    %v1271 = vpop.xlane.xlu0 %1270
    %v1272 = vmul.f32 %v1268, %v1259
    %v1273 = vmul.f32 %v1271, %v1259
    %v1274 = vadd.f32 %v1272, 1e-05
    %v1275 = vadd.f32 %v1273, 1e-05
    %v1276 = vrsqrt.pop %v1274
    %v1277 = vrsqrt.pop %v1275
    %v1278 = vmul.f32 %v1262, %v1276
    %v1279 = vmul.f32 %v1263, %v1277
    %v1280 = vlaneseq
    %v1281 = vshrl.u32 %v1280, 7
    %v1282 = vsub.s32 0, %v1281
    %v1283 = vrot.slane %v95, %v1282
    %v1284 = vmul.f32 %v1278, %v1283
    %v1285 = vmul.f32 %v1279, %v1283
    %v1286 = vlaneseq
    %v1287 = vshrl.u32 %v1286, 7
    %v1288 = vsub.s32 0, %v1287
    %v1289 = vrot.slane %v96, %v1288
    %v1290 = vadd.f32 %v1284, %v1289
    %v1291 = vadd.f32 %v1285, %v1289
    %v1292 = vld [vmem:[%s5] sm:$0xff]
    %v1293 = vld [vmem:[%s5 + $0x8] sm:$0xff]
    %v1294 = vld [vmem:[%s5 + $0x10] sm:$0xff]
    %v1295 = vld [vmem:[%s5 + $0x18] sm:$0xff]
    %v1296 = vld [vmem:[%s6] sm:$0x1]
    %v1298 = vlaneseq
    %v1299 = vshrl.u32 %v1298, 7
    %v1300 = vsub.s32 0, %v1299
    %v1301 = vrot.slane %v1296, %v1300
    %v1304 = vsel %vm104, %v1290, 0
    %v1307 = vsel %vm104, %v1291, 0
    %1309 = vmatprep.subr.mxu0 0.0
    %1310 = vmatpush1.msra.mxu0 %v1292
    %1311 = vmatprep.subr.mxu0 0.0
    %1312 = vmatpush1.msra.mxu0 %v1293
    %1313 = vmatprep.subr.mxu0 0.0
    %1314 = vmatpush1.msra.mxu0 %v1294
    %1315 = vmatprep.subr.mxu0 0.0
    %1316 = vmatpush1.msra.mxu0 %v1295
    %1317 = vmatprep.subr.mxu0 0.0
    %1318 = vmatpush1.msra.mxu0 0.0
    %1319 = vmatprep.subr.mxu0 0.0
    %1320 = vmatpush1.msra.mxu0 0.0
    %1321 = vmatprep.subr.mxu0 0.0
    %1322 = vmatpush1.msra.mxu0 0.0
    %1323 = vmatprep.subr.mxu0 0.0
    %1324 = vmatpush1.msra.mxu0 0.0
    %1325 = vmatprep.subr.mxu0 0.0
    %1326 = vmatpush1.msra.mxu0 0.0
    %1327 = vmatprep.subr.mxu0 0.0
    %1328 = vmatpush1.msra.mxu0 0.0
    %1329 = vmatprep.subr.mxu0 0.0
    %1330 = vmatpush1.msra.mxu0 0.0
    %1331 = vmatprep.subr.mxu0 0.0
    %1332 = vmatpush1.msra.mxu0 0.0
    %1333 = vmatprep.subr.mxu0 0.0
    %1334 = vmatpush1.msra.mxu0 0.0
    %1335 = vmatprep.subr.mxu0 0.0
    %1336 = vmatpush1.msra.mxu0 0.0
    %1337 = vmatprep.subr.mxu0 0.0
    %1338 = vmatpush1.msra.mxu0 0.0
    %1339 = vmatprep.subr.mxu0 0.0
    %1340 = vmatpush1.msra.mxu0 0.0
    %1341 = vmatprep.subr.mxu0 0.0
    %1342 = vmatpush1.msra.mxu0 0.0
    %1343 = vmatprep.subr.mxu0 0.0
    %1344 = vmatpush1.msra.mxu0 0.0
    %1345 = vmatprep.subr.mxu0 0.0
    %1346 = vmatpush1.msra.mxu0 0.0
    %1347 = vmatprep.subr.mxu0 0.0
    %1348 = vmatpush1.msra.mxu0 0.0
    %1349 = vmatprep.subr.mxu0 0.0
    %1350 = vmatpush1.msra.mxu0 0.0
    %1351 = vmatprep.subr.mxu0 0.0
    %1352 = vmatpush1.msra.mxu0 0.0
    %1353 = vmatprep.subr.mxu0 0.0
    %1354 = vmatpush1.msra.mxu0 0.0
    %1355 = vmatprep.subr.mxu0 0.0
    %1356 = vmatpush1.msra.mxu0 0.0
    %1357 = vmatprep.subr.mxu0 0.0
    %1358 = vmatpush1.msra.mxu0 0.0
    %1359 = vmatprep.subr.mxu0 0.0
    %1360 = vmatpush1.msra.mxu0 0.0
    %1361 = vmatprep.subr.mxu0 0.0
    %1362 = vmatpush1.msra.mxu0 0.0
    %1363 = vmatprep.subr.mxu0 0.0
    %1364 = vmatpush1.msra.mxu0 0.0
    %1365 = vmatprep.subr.mxu0 0.0
    %1366 = vmatpush1.msra.mxu0 0.0
    %1367 = vmatprep.subr.mxu0 0.0
    %1368 = vmatpush1.msra.mxu0 0.0
    %1369 = vmatprep.subr.mxu0 0.0
    %1370 = vmatpush1.msra.mxu0 0.0
    %1371 = vmatprep.subr.mxu0 0.0
    %1372 = vmatpush1.msra.mxu0 0.0
    %1373 = vmatprep.mubr.f32.mxu0 0.0
    %1374 = vmatmul.mubr.f32.gmra.mrb[0].mxu0 %v1304
    %v1375 = vpop.f32.mrb[0].mxu0
    %v1376 = vadd.f32 %v1301, %v1375
    %v1377 = vpop.f32.mrb[0].mxu0
    %1378 = vmatprep.mubr.f32.mxu0 0.0
    %1379 = vmatmul.mubr.f32.gmra.mrb[0].mxu0 %v1307
    %v1380 = vpop.f32.mrb[0].mxu0
    %v1381 = vadd.f32 %v1301, %v1380
    %v1382 = vpop.f32.mrb[0].mxu0
    %1383 = vdwg.mxu0
    %v1384 = vmax.f32 %v1376, 0.0
    %v1385 = vmax.f32 %v1381, 0.0
    %v1386 = vld [vmem:[%s7] sm:$0xff]
    %v1387 = vld [vmem:[%s7 + $0x8] sm:$0xff]
    %v1388 = vld [vmem:[%s7 + $0x10] sm:$0xff]
    %v1389 = vld [vmem:[%s7 + $0x18] sm:$0xff]
    %v1390 = vld [vmem:[%s7 + $0x20] sm:$0xff]
    %v1391 = vld [vmem:[%s7 + $0x28] sm:$0xff]
    %v1392 = vld [vmem:[%s7 + $0x30] sm:$0xff]
    %v1393 = vld [vmem:[%s7 + $0x38] sm:$0xff]
    %v1394 = vld [vmem:[%s7 + $0x40] sm:$0xff]
    %v1395 = vld [vmem:[%s7 + $0x48] sm:$0xff]
    %v1396 = vld [vmem:[%s7 + $0x50] sm:$0xff]
    %v1397 = vld [vmem:[%s7 + $0x58] sm:$0xff]
    %v1398 = vld [vmem:[%s7 + $0x60] sm:$0xff]
    %v1399 = vld [vmem:[%s7 + $0x68] sm:$0xff]
    %v1400 = vld [vmem:[%s7 + $0x70] sm:$0xff]
    %v1401 = vld [vmem:[%s7 + $0x78] sm:$0xff]
    %v1402 = vlaneseq
    %v1403 = vshrl.u32 %v1402, 7
    %v1404 = vsub.s32 0, %v1403
    %v1405 = vrot.slane %v97, %v1404
    %1406 = vmatprep.subr.mxu0 0.0
    %1407 = vmatpush1.msra.mxu0 %v1386
    %1408 = vmatprep.subr.mxu0 0.0
    %1409 = vmatpush1.msra.mxu0 %v1387
    %1410 = vmatprep.subr.mxu0 0.0
    %1411 = vmatpush1.msra.mxu0 %v1388
    %1412 = vmatprep.subr.mxu0 0.0
    %1413 = vmatpush1.msra.mxu0 %v1389
    %1414 = vmatprep.subr.mxu0 0.0
    %1415 = vmatpush1.msra.mxu0 %v1390
    %1416 = vmatprep.subr.mxu0 0.0
    %1417 = vmatpush1.msra.mxu0 %v1391
    %1418 = vmatprep.subr.mxu0 0.0
    %1419 = vmatpush1.msra.mxu0 %v1392
    %1420 = vmatprep.subr.mxu0 0.0
    %1421 = vmatpush1.msra.mxu0 %v1393
    %1422 = vmatprep.subr.mxu0 0.0
    %1423 = vmatpush1.msra.mxu0 %v1394
    %1424 = vmatprep.subr.mxu0 0.0
    %1425 = vmatpush1.msra.mxu0 %v1395
    %1426 = vmatprep.subr.mxu0 0.0
    %1427 = vmatpush1.msra.mxu0 %v1396
    %1428 = vmatprep.subr.mxu0 0.0
    %1429 = vmatpush1.msra.mxu0 %v1397
    %1430 = vmatprep.subr.mxu0 0.0
    %1431 = vmatpush1.msra.mxu0 %v1398
    %1432 = vmatprep.subr.mxu0 0.0
    %1433 = vmatpush1.msra.mxu0 %v1399
    %1434 = vmatprep.subr.mxu0 0.0
    %1435 = vmatpush1.msra.mxu0 %v1400
    %1436 = vmatprep.subr.mxu0 0.0
    %1437 = vmatpush1.msra.mxu0 %v1401
    %1438 = vmatprep.subr.mxu0 0.0
    %1439 = vmatpush1.msra.mxu0 0.0
    %1440 = vmatprep.subr.mxu0 0.0
    %1441 = vmatpush1.msra.mxu0 0.0
    %1442 = vmatprep.subr.mxu0 0.0
    %1443 = vmatpush1.msra.mxu0 0.0
    %1444 = vmatprep.subr.mxu0 0.0
    %1445 = vmatpush1.msra.mxu0 0.0
    %1446 = vmatprep.subr.mxu0 0.0
    %1447 = vmatpush1.msra.mxu0 0.0
    %1448 = vmatprep.subr.mxu0 0.0
    %1449 = vmatpush1.msra.mxu0 0.0
    %1450 = vmatprep.subr.mxu0 0.0
    %1451 = vmatpush1.msra.mxu0 0.0
    %1452 = vmatprep.subr.mxu0 0.0
    %1453 = vmatpush1.msra.mxu0 0.0
    %1454 = vmatprep.subr.mxu0 0.0
    %1455 = vmatpush1.msra.mxu0 0.0
    %1456 = vmatprep.subr.mxu0 0.0
    %1457 = vmatpush1.msra.mxu0 0.0
    %1458 = vmatprep.subr.mxu0 0.0
    %1459 = vmatpush1.msra.mxu0 0.0
    %1460 = vmatprep.subr.mxu0 0.0
    %1461 = vmatpush1.msra.mxu0 0.0
    %1462 = vmatprep.subr.mxu0 0.0
    %1463 = vmatpush1.msra.mxu0 0.0
    %1464 = vmatprep.subr.mxu0 0.0
    %1465 = vmatpush1.msra.mxu0 0.0
    %1466 = vmatprep.subr.mxu0 0.0
    %1467 = vmatpush1.msra.mxu0 0.0
    %1468 = vmatprep.subr.mxu0 0.0
    %1469 = vmatpush1.msra.mxu0 0.0
    %1470 = vmatprep.mubr.f32.mxu0 0.0
    %1471 = vmatmul.mubr.f32.gmra.mrb[0].mxu0 %v1384
    %v1472 = vpop.f32.mrb[0].mxu0
    %v1473 = vadd.f32 %v1405, %v1472
    %v1474 = vpop.f32.mrb[0].mxu0
    %1475 = vmatprep.mubr.f32.mxu0 0.0
    %1476 = vmatmul.mubr.f32.gmra.mrb[0].mxu0 %v1385
    %v1477 = vpop.f32.mrb[0].mxu0
    %v1478 = vadd.f32 %v1405, %v1477
    %v1479 = vpop.f32.mrb[0].mxu0
    %1480 = vdwg.mxu0
    %v1481 = vadd.f32 %v1473, %v1290
    %v1482 = vadd.f32 %v1478, %v1291
    %v1483 = vsel %vm104, %v1481, 0.0
    %1484 = vadd.xlane.f32.xlu0 %v1483
    %v1485 = vpop.xlane.xlu0 %1484
    %v1486 = vsel %vm104, %v1482, 0.0
    %1487 = vadd.xlane.f32.xlu0 %v1486
    %v1488 = vpop.xlane.xlu0 %1487
    %v1489 = vmul.f32 %v1485, %v1259
    %v1490 = vmul.f32 %v1488, %v1259
    %v1491 = vsub.f32 %v1481, %v1489
    %v1492 = vsub.f32 %v1482, %v1490
    %v1493 = vmul.f32 %v1491, %v1491
    %v1494 = vmul.f32 %v1492, %v1492
    %v1495 = vsel %vm104, %v1493, 0.0
    %1496 = vadd.xlane.f32.xlu0 %v1495
    %v1497 = vpop.xlane.xlu0 %1496
    %v1498 = vsel %vm104, %v1494, 0.0
    %1499 = vadd.xlane.f32.xlu0 %v1498
    %v1500 = vpop.xlane.xlu0 %1499
    %v1501 = vmul.f32 %v1497, %v1259
    %v1502 = vmul.f32 %v1500, %v1259
    %v1503 = vadd.f32 %v1501, 1e-05
    %v1504 = vadd.f32 %v1502, 1e-05
    %v1505 = vrsqrt.pop %v1503
    %v1506 = vrsqrt.pop %v1504
    %v1507 = vmul.f32 %v1491, %v1505
    %v1508 = vmul.f32 %v1492, %v1506
    %v1509 = vlaneseq
    %v1510 = vshrl.u32 %v1509, 7
    %v1511 = vsub.s32 0, %v1510
    %v1512 = vrot.slane %v98, %v1511
    %v1513 = vmul.f32 %v1507, %v1512
    %v1514 = vmul.f32 %v1508, %v1512
    %v1515 = vlaneseq
    %v1516 = vshrl.u32 %v1515, 7
    %v1517 = vsub.s32 0, %v1516
    %v1518 = vrot.slane %v99, %v1517
    %v1519 = vadd.f32 %v1513, %v1518
    %v1520 = vadd.f32 %v1514, %v1518
    %1521 = vst.msk [vmem:[#allocation10] sm:$0xff] %vm104, %v1519
    %1522 = vst.msk [vmem:[#allocation10 + $0x8] sm:$0xff] %vm104, %v1520
    // Predicated region
    $region54: #{tpu_custom_call.1} parent=1 // pred_check
      _
    $region55: #{tpu_custom_call.1} parent=1 // pred_check_branch
      %1524 = sbr.rel (0) target = $region57
    $region56: #{tpu_custom_call.1} parent=1 // pred_region
      %s1526 = ssub.s32 256, 256
      %1527 = vsyncadd [#allocation4], %s1526
      %s1528 = sshll.u32 [#allocation10], 4
      %s1529 = int_to_ptr.vmem [resolvable:$true] %s1528
      %1534 = dma.vmem_to_hbm [thread:$0]  %s1529, 256, %s9, [#allocation4], 128, 128, 8
    $region57: #{tpu_custom_call.1} parent=1 // pred_fallthru
      _
    // Predicated region
    $region58: #{tpu_custom_call.1} parent=1 // pred_check
      _
    $region59: #{tpu_custom_call.1} parent=1 // pred_check_branch
      %1536 = sbr.rel (0) target = $region61
    $region60: #{tpu_custom_call.1} parent=1 // pred_region
      %1537 = dma.done [#allocation4], 256
    $region61: #{tpu_custom_call.1} parent=1 // pred_fallthru
      _
    %1538 = vsyncpa [#allocation3], 1
    %1539 = vsyncpa [#allocation6], 1
    %1540 = vsyncpa [#allocation9], 1
    %1541 = vsyncpa [#allocation4], 1

</llo_original>
